<compile_context>
chip_gen: v5e
topology: v5e:2x2
jax: 0.10.0
libtpu: 0.0.40
codegen_flags: <defaults>
</compile_context>

<pallas_src>
import jax
import jax.numpy as jnp
from jax.experimental import pallas as pl
from jax.experimental.pallas import tpu as pltpu

# ----- model hyper-parameters: Transformer(dim, depth, heads, dim_head, mlp_dim) -----
DIM = 32          # dim
DEPTH = 2         # depth
HEADS = 4         # heads
DIM_HEAD = 8      # dim_head
MLP_DIM = 64      # mlp_dim
INNER = HEADS * DIM_HEAD          # 32 (project_out active since heads != 1)
SCALE = DIM_HEAD ** -0.5
EPS = 1e-5                        # torch nn.LayerNorm default eps


# ---------------------------------------------------------------------------
# in-kernel helpers
# ---------------------------------------------------------------------------
def _layernorm(x, g, b):
    mu = jnp.mean(x, axis=-1, keepdims=True)
    xc = x - mu
    var = jnp.mean(xc * xc, axis=-1, keepdims=True)
    return xc * jax.lax.rsqrt(var + EPS) * g + b


def _gelu_exact(x):
    # torch nn.GELU() default: 0.5 * x * (1 + erf(x / sqrt(2)))
    return 0.5 * x * (1.0 + jax.lax.erf(x * (2.0 ** -0.5)))


# ---------------------------------------------------------------------------
# fused Pallas kernel: DEPTH transformer layers + final LayerNorm
# one grid step == one batch element (N rows); weights resident across steps
# ---------------------------------------------------------------------------
def transformer_kernel(x_ref, wq_ref, wk_ref, wv_ref, wo_ref, w1_ref, w2_ref,
                       vec_ref, b1_ref, norm_ref, o_ref):
    """
    x_ref    : (N, DIM)               one batch element's activations
    wq/wk/wv : (DEPTH, DIM, INNER)    lane-aligned projection weights
    wo_ref   : (DEPTH, INNER, DIM)
    w1_ref   : (DEPTH, DIM, MLP_DIM)
    w2_ref   : (DEPTH, MLP_DIM, DIM)
    vec_ref  : (DEPTH, 6, DIM)        rows: ln1_g, ln1_b, bo, ln2_g, ln2_b, b2
    b1_ref   : (DEPTH, MLP_DIM)
    norm_ref : (2, DIM)               final LayerNorm gamma / beta
    o_ref    : (N, DIM)
    """
    x = x_ref[...]                               # (N, DIM) f32, residual stream

    for l in range(DEPTH):                       # static unroll over layers
        wq, wk, wv = wq_ref[l], wk_ref[l], wv_ref[l]
        wo, w1, w2 = wo_ref[l], w1_ref[l], w2_ref[l]
        vl = vec_ref[l]                          # (6, DIM)
        ln1_g, ln1_b, bo = vl[0], vl[1], vl[2]
        ln2_g, ln2_b, b2 = vl[3], vl[4], vl[5]
        b1 = b1_ref[l]                           # (MLP_DIM,)

        # ---------- x = Attention(LN(x)) + x ----------
        h = _layernorm(x, ln1_g, ln1_b)
        # three lane-aligned projections (each result starts at lane 0)
        q = jnp.dot(h, wq, preferred_element_type=jnp.float32) * SCALE   # (N, INNER)
        k = jnp.dot(h, wk, preferred_element_type=jnp.float32)
        v = jnp.dot(h, wv, preferred_element_type=jnp.float32)

        ctx_heads = []
        for hh in range(HEADS):                  # small static head loop, 2-D dots only
            s0 = hh * DIM_HEAD
            qh = q[:, s0:s0 + DIM_HEAD]
            kh = k[:, s0:s0 + DIM_HEAD]
            vh = v[:, s0:s0 + DIM_HEAD]

            dots = jax.lax.dot_general(qh, kh, (((1,), (1,)), ((), ())),
                                       preferred_element_type=jnp.float32)  # (N, N)
            dots = dots - jnp.max(dots, axis=-1, keepdims=True)
            e = jnp.exp(dots)
            denom = jnp.sum(e, axis=-1, keepdims=True)
            r = pl.reciprocal(denom, approx=True)        # EUP slot (cheap)
            r = r * (2.0 - denom * r)                    # one Newton step -> ~f32 exact
            attn = e * r
            ctx_heads.append(jnp.dot(attn, vh, preferred_element_type=jnp.float32))

        # fuse head outputs: static lane-offset concat, then ONE K=INNER dot with wo
        ctx = jnp.concatenate(ctx_heads, axis=-1)                         # (N, INNER)
        x = x + jnp.dot(ctx, wo, preferred_element_type=jnp.float32) + bo

        # ---------- x = FeedForward(LN(x)) + x ----------
        h2 = _layernorm(x, ln2_g, ln2_b)
        y = jnp.dot(h2, w1, preferred_element_type=jnp.float32) + b1
        y = _gelu_exact(y)
        x = x + jnp.dot(y, w2, preferred_element_type=jnp.float32) + b2

    # ---------- final LayerNorm ----------
    o_ref[...] = _layernorm(x, norm_ref[0], norm_ref[1])


# ---------------------------------------------------------------------------
# parameter packing (runs ONCE at init, outside the jitted forward)
# ---------------------------------------------------------------------------
def pack_params(params):
    wq, wk, wv, wo, w1, w2, vecs, b1s = [], [], [], [], [], [], [], []
    for p in params['layers']:
        wq.append(p['wqkv'][:, :INNER])
        wk.append(p['wqkv'][:, INNER:2 * INNER])
        wv.append(p['wqkv'][:, 2 * INNER:])
        wo.append(p['wo'])
        w1.append(p['w1'])
        w2.append(p['w2'])
        vecs.append(jnp.stack([p['ln1_g'], p['ln1_b'], p['bo'],
                               p['ln2_g'], p['ln2_b'], p['b2']]))   # (6, DIM)
        b1s.append(p['b1'])
    packed = {
        'wq': jnp.stack(wq), 'wk': jnp.stack(wk), 'wv': jnp.stack(wv),
        'wo': jnp.stack(wo), 'w1': jnp.stack(w1), 'w2': jnp.stack(w2),
        'vec': jnp.stack(vecs), 'b1': jnp.stack(b1s),
        'norm': jnp.stack([params['norm_g'], params['norm_b']]),
    }
    return jax.tree_util.tree_map(jax.block_until_ready, packed)


# ---------------------------------------------------------------------------
# jitted forward: reshape + one fused pallas_call
# ---------------------------------------------------------------------------
def _const_spec(shape):
    nd = len(shape)
    return pl.BlockSpec(shape, lambda b, _nd=nd: (0,) * _nd)   # resident across grid


@jax.jit
def transformer_forward(x, packed):
    B, N, D = x.shape
    x2 = x.reshape(B * N, D)

    weight_names = ('wq', 'wk', 'wv', 'wo', 'w1', 'w2', 'vec', 'b1', 'norm')
    weights = [packed[n] for n in weight_names]

    out = pl.pallas_call(
        transformer_kernel,
        out_shape=jax.ShapeDtypeStruct((B * N, D), x.dtype),
        grid=(B,),                                             # one step per batch element
        in_specs=[pl.BlockSpec((N, D), lambda b: (b, 0))]      # activations: per-batch row block
                 + [_const_spec(w.shape) for w in weights],    # weights: loaded once, resident
        out_specs=pl.BlockSpec((N, D), lambda b: (b, 0)),
        compiler_params=pltpu.CompilerParams(
            dimension_semantics=("parallel",)),                # shards across v7x's 2 TCs
    )(x2, *weights)
    return out.reshape(B, N, D)


# ---------------------------------------------------------------------------
# deterministic parameter init (synthetic; shapes follow the nn.Module __init__)
# ---------------------------------------------------------------------------
def init_params(key):
    def nrm(k, shape, scale=0.05):
        return (scale * jax.random.normal(k, shape)).astype(jnp.float32)

    params = {'layers': []}
    for i in range(DEPTH):
        ks = jax.random.split(jax.random.fold_in(key, i), 11)
        params['layers'].append({
            'ln1_g': 1.0 + nrm(ks[0], (DIM,), 0.1),
            'ln1_b': nrm(ks[1], (DIM,), 0.1),
            'wqkv': nrm(ks[2], (DIM, 3 * INNER)),      # to_qkv (no bias)
            'wo':   nrm(ks[3], (INNER, DIM)),          # to_out linear
            'bo':   nrm(ks[4], (DIM,)),
            'ln2_g': 1.0 + nrm(ks[5], (DIM,), 0.1),
            'ln2_b': nrm(ks[6], (DIM,), 0.1),
            'w1':   nrm(ks[7], (DIM, MLP_DIM)),
            'b1':   nrm(ks[8], (MLP_DIM,)),
            'w2':   nrm(ks[9], (MLP_DIM, DIM)),
            'b2':   nrm(ks[10], (DIM,)),
        })
    kg, kb = jax.random.split(jax.random.fold_in(key, DEPTH))
    params['norm_g'] = 1.0 + nrm(kg, (DIM,), 0.1)
    params['norm_b'] = nrm(kb, (DIM,), 0.1)
    return params


# ---------------------------------------------------------------------------
# pure-JAX reference (mirrors the PyTorch forward exactly)
# ---------------------------------------------------------------------------
def reference_forward(x, params):
    def ln(t, g, b):
        mu = t.mean(-1, keepdims=True)
        var = ((t - mu) ** 2).mean(-1, keepdims=True)
        return (t - mu) / jnp.sqrt(var + EPS) * g + b

    B, N, _ = x.shape
    for p in params['layers']:
        h = ln(x, p['ln1_g'], p['ln1_b'])
        qkv = h @ p['wqkv']
        q, k, v = jnp.split(qkv, 3, axis=-1)
        q = q.reshape(B, N, HEADS, DIM_HEAD)
        k = k.reshape(B, N, HEADS, DIM_HEAD)
        v = v.reshape(B, N, HEADS, DIM_HEAD)
        dots = jnp.einsum('bnhd,bmhd->bhnm', q, k) * SCALE
        attn = jax.nn.softmax(dots, axis=-1)
        out = jnp.einsum('bhnm,bmhd->bnhd', attn, v).reshape(B, N, INNER)
        x = x + (out @ p['wo'] + p['bo'])
        h2 = ln(x, p['ln2_g'], p['ln2_b'])
        y = jax.nn.gelu(h2 @ p['w1'] + p['b1'], approximate=False)
        x = x + (y @ p['w2'] + p['b2'])
    return ln(x, params['norm_g'], params['norm_b'])


# ---------------------------------------------------------------------------
if __name__ == "__main__":
    B, N = 2, 8
    key = jax.random.PRNGKey(0)
    kx, kp = jax.random.split(key)
    x = jax.random.normal(kx, (B, N, DIM), dtype=jnp.float32)
    params = init_params(kp)
    packed = pack_params(params)        # packing hoisted out of the jitted path

    out = jax.block_until_ready(transformer_forward(x, packed))
    ref = reference_forward(x, params)

    assert out.shape == (B, N, DIM)
    err = float(jnp.max(jnp.abs(out - ref)))
    assert jnp.allclose(out, ref, rtol=2e-3, atol=2e-4), f"mismatch vs reference (max abs err={err})"

    print("KERNEL_OK")
</pallas_src>

<mosaic_0001>
module attributes {stable_mosaic.version = 11 : i64} {
  func.func @transformer_kernel(%arg0: i32, %arg1: memref<8x32xf32, #tpu.memory_space<vmem>>, %arg2: memref<2x32x32xf32, #tpu.memory_space<vmem>>, %arg3: memref<2x32x32xf32, #tpu.memory_space<vmem>>, %arg4: memref<2x32x32xf32, #tpu.memory_space<vmem>>, %arg5: memref<2x32x32xf32, #tpu.memory_space<vmem>>, %arg6: memref<2x32x64xf32, #tpu.memory_space<vmem>>, %arg7: memref<2x64x32xf32, #tpu.memory_space<vmem>>, %arg8: memref<2x6x32xf32, #tpu.memory_space<vmem>>, %arg9: memref<2x64xf32, #tpu.memory_space<vmem>>, %arg10: memref<2x32xf32, #tpu.memory_space<vmem>>, %arg11: memref<8x32xf32, #tpu.memory_space<vmem>>) attributes {dimension_semantics = [#tpu.dimension_semantics<parallel>], iteration_bounds = array<i64: 2>, scalar_prefetch = 0 : i64, scratch_operands = 0 : i64, tpu.core_type = #tpu.core_type<tc>, window_params = [{transform_indices = @transform_0, window_bounds = array<i64: 8, 32>}, {pipeline_mode = #tpu.pipeline_mode<synchronous>, transform_indices = @transform_1, window_bounds = array<i64: 2, 32, 32>}, {pipeline_mode = #tpu.pipeline_mode<synchronous>, transform_indices = @transform_2, window_bounds = array<i64: 2, 32, 32>}, {pipeline_mode = #tpu.pipeline_mode<synchronous>, transform_indices = @transform_3, window_bounds = array<i64: 2, 32, 32>}, {pipeline_mode = #tpu.pipeline_mode<synchronous>, transform_indices = @transform_4, window_bounds = array<i64: 2, 32, 32>}, {pipeline_mode = #tpu.pipeline_mode<synchronous>, transform_indices = @transform_5, window_bounds = array<i64: 2, 32, 64>}, {pipeline_mode = #tpu.pipeline_mode<synchronous>, transform_indices = @transform_6, window_bounds = array<i64: 2, 64, 32>}, {pipeline_mode = #tpu.pipeline_mode<synchronous>, transform_indices = @transform_7, window_bounds = array<i64: 2, 6, 32>}, {pipeline_mode = #tpu.pipeline_mode<synchronous>, transform_indices = @transform_8, window_bounds = array<i64: 2, 64>}, {pipeline_mode = #tpu.pipeline_mode<synchronous>, transform_indices = @transform_9, window_bounds = array<i64: 2, 32>}, {transform_indices = @transform_10, window_bounds = array<i64: 8, 32>}]} {
    %c0 = arith.constant 0 : index
    %c0_0 = arith.constant 0 : index
    %0 = vector.load %arg1[%c0, %c0_0] : memref<8x32xf32, #tpu.memory_space<vmem>>, vector<8x32xf32>
    %c0_1 = arith.constant 0 : index
    %c0_2 = arith.constant 0 : index
    %c0_3 = arith.constant 0 : index
    %1 = vector.load %arg2[%c0_1, %c0_2, %c0_3] : memref<2x32x32xf32, #tpu.memory_space<vmem>>, vector<1x32x32xf32>
    %2 = vector.shape_cast %1 : vector<1x32x32xf32> to vector<32x32xf32>
    %c0_4 = arith.constant 0 : index
    %c0_5 = arith.constant 0 : index
    %c0_6 = arith.constant 0 : index
    %3 = vector.load %arg3[%c0_4, %c0_5, %c0_6] : memref<2x32x32xf32, #tpu.memory_space<vmem>>, vector<1x32x32xf32>
    %4 = vector.shape_cast %3 : vector<1x32x32xf32> to vector<32x32xf32>
    %c0_7 = arith.constant 0 : index
    %c0_8 = arith.constant 0 : index
    %c0_9 = arith.constant 0 : index
    %5 = vector.load %arg4[%c0_7, %c0_8, %c0_9] : memref<2x32x32xf32, #tpu.memory_space<vmem>>, vector<1x32x32xf32>
    %6 = vector.shape_cast %5 : vector<1x32x32xf32> to vector<32x32xf32>
    %c0_10 = arith.constant 0 : index
    %c0_11 = arith.constant 0 : index
    %c0_12 = arith.constant 0 : index
    %7 = vector.load %arg5[%c0_10, %c0_11, %c0_12] : memref<2x32x32xf32, #tpu.memory_space<vmem>>, vector<1x32x32xf32>
    %8 = vector.shape_cast %7 : vector<1x32x32xf32> to vector<32x32xf32>
    %c0_13 = arith.constant 0 : index
    %c0_14 = arith.constant 0 : index
    %c0_15 = arith.constant 0 : index
    %9 = vector.load %arg6[%c0_13, %c0_14, %c0_15] : memref<2x32x64xf32, #tpu.memory_space<vmem>>, vector<1x32x64xf32>
    %10 = vector.shape_cast %9 : vector<1x32x64xf32> to vector<32x64xf32>
    %c0_16 = arith.constant 0 : index
    %c0_17 = arith.constant 0 : index
    %c0_18 = arith.constant 0 : index
    %11 = vector.load %arg7[%c0_16, %c0_17, %c0_18] : memref<2x64x32xf32, #tpu.memory_space<vmem>>, vector<1x64x32xf32>
    %12 = vector.shape_cast %11 : vector<1x64x32xf32> to vector<64x32xf32>
    %c0_19 = arith.constant 0 : index
    %c0_20 = arith.constant 0 : index
    %c0_21 = arith.constant 0 : index
    %13 = vector.load %arg8[%c0_19, %c0_20, %c0_21] : memref<2x6x32xf32, #tpu.memory_space<vmem>>, vector<1x6x32xf32>
    %14 = vector.shape_cast %13 : vector<1x6x32xf32> to vector<6x32xf32>
    %15 = vector.extract_strided_slice %14 {offsets = [0, 0], sizes = [1, 32], strides = [1, 1]} : vector<6x32xf32> to vector<1x32xf32>
    %16 = vector.shape_cast %15 : vector<1x32xf32> to vector<32xf32>
    %17 = vector.extract_strided_slice %14 {offsets = [1, 0], sizes = [1, 32], strides = [1, 1]} : vector<6x32xf32> to vector<1x32xf32>
    %18 = vector.shape_cast %17 : vector<1x32xf32> to vector<32xf32>
    %19 = vector.extract_strided_slice %14 {offsets = [2, 0], sizes = [1, 32], strides = [1, 1]} : vector<6x32xf32> to vector<1x32xf32>
    %20 = vector.shape_cast %19 : vector<1x32xf32> to vector<32xf32>
    %21 = vector.extract_strided_slice %14 {offsets = [3, 0], sizes = [1, 32], strides = [1, 1]} : vector<6x32xf32> to vector<1x32xf32>
    %22 = vector.shape_cast %21 : vector<1x32xf32> to vector<32xf32>
    %23 = vector.extract_strided_slice %14 {offsets = [4, 0], sizes = [1, 32], strides = [1, 1]} : vector<6x32xf32> to vector<1x32xf32>
    %24 = vector.shape_cast %23 : vector<1x32xf32> to vector<32xf32>
    %25 = vector.extract_strided_slice %14 {offsets = [5, 0], sizes = [1, 32], strides = [1, 1]} : vector<6x32xf32> to vector<1x32xf32>
    %26 = vector.shape_cast %25 : vector<1x32xf32> to vector<32xf32>
    %c0_22 = arith.constant 0 : index
    %c0_23 = arith.constant 0 : index
    %27 = vector.load %arg9[%c0_22, %c0_23] : memref<2x64xf32, #tpu.memory_space<vmem>>, vector<1x64xf32>
    %28 = vector.shape_cast %27 : vector<1x64xf32> to vector<64xf32>
    %cst = arith.constant dense<0.000000e+00> : vector<8xf32>
    %29 = vector.multi_reduction <add>, %0, %cst [1] : vector<8x32xf32> to vector<8xf32>
    %30 = vector.shape_cast %29 : vector<8xf32> to vector<8x1xf32>
    %cst_24 = arith.constant 3.200000e+01 : f32
    %31 = vector.broadcast %cst_24 : f32 to vector<8x1xf32>
    %32 = arith.divf %30, %31 : vector<8x1xf32>
    %33 = vector.broadcast %32 : vector<8x1xf32> to vector<8x32xf32>
    %34 = arith.subf %0, %33 : vector<8x32xf32>
    %35 = arith.mulf %34, %34 : vector<8x32xf32>
    %cst_25 = arith.constant dense<0.000000e+00> : vector<8xf32>
    %36 = vector.multi_reduction <add>, %35, %cst_25 [1] : vector<8x32xf32> to vector<8xf32>
    %37 = vector.shape_cast %36 : vector<8xf32> to vector<8x1xf32>
    %cst_26 = arith.constant 3.200000e+01 : f32
    %38 = vector.broadcast %cst_26 : f32 to vector<8x1xf32>
    %39 = arith.divf %37, %38 : vector<8x1xf32>
    %cst_27 = arith.constant 9.99999974E-6 : f32
    %40 = vector.broadcast %cst_27 : f32 to vector<8x1xf32>
    %41 = arith.addf %39, %40 : vector<8x1xf32>
    %42 = math.rsqrt %41 : vector<8x1xf32>
    %43 = vector.broadcast %42 : vector<8x1xf32> to vector<8x32xf32>
    %44 = arith.mulf %34, %43 : vector<8x32xf32>
    %45 = vector.shape_cast %16 : vector<32xf32> to vector<1x32xf32>
    %46 = vector.broadcast %45 : vector<1x32xf32> to vector<8x32xf32>
    %47 = arith.mulf %44, %46 : vector<8x32xf32>
    %48 = vector.shape_cast %18 : vector<32xf32> to vector<1x32xf32>
    %49 = vector.broadcast %48 : vector<1x32xf32> to vector<8x32xf32>
    %50 = arith.addf %47, %49 : vector<8x32xf32>
    %cst_28 = arith.constant dense<0.000000e+00> : vector<8x32xf32>
    %51 = tpu.matmul %50, %2, %cst_28 {dimension_numbers = #tpu.dot_dimension_numbers<[1], [0], [0], [1], [0, 0, 1, 1], [], []>} : vector<8x32xf32>, vector<32x32xf32>, vector<8x32xf32> -> vector<8x32xf32>
    %cst_29 = arith.constant 0.353553385 : f32
    %52 = vector.broadcast %cst_29 : f32 to vector<8x32xf32>
    %53 = arith.mulf %51, %52 : vector<8x32xf32>
    %cst_30 = arith.constant dense<0.000000e+00> : vector<8x32xf32>
    %54 = tpu.matmul %50, %4, %cst_30 {dimension_numbers = #tpu.dot_dimension_numbers<[1], [0], [0], [1], [0, 0, 1, 1], [], []>} : vector<8x32xf32>, vector<32x32xf32>, vector<8x32xf32> -> vector<8x32xf32>
    %cst_31 = arith.constant dense<0.000000e+00> : vector<8x32xf32>
    %55 = tpu.matmul %50, %6, %cst_31 {dimension_numbers = #tpu.dot_dimension_numbers<[1], [0], [0], [1], [0, 0, 1, 1], [], []>} : vector<8x32xf32>, vector<32x32xf32>, vector<8x32xf32> -> vector<8x32xf32>
    %56 = vector.extract_strided_slice %53 {offsets = [0, 0], sizes = [8, 8], strides = [1, 1]} : vector<8x32xf32> to vector<8x8xf32>
    %57 = vector.extract_strided_slice %54 {offsets = [0, 0], sizes = [8, 8], strides = [1, 1]} : vector<8x32xf32> to vector<8x8xf32>
    %58 = vector.extract_strided_slice %55 {offsets = [0, 0], sizes = [8, 8], strides = [1, 1]} : vector<8x32xf32> to vector<8x8xf32>
    %cst_32 = arith.constant dense<0.000000e+00> : vector<8x8xf32>
    %59 = tpu.matmul %56, %57, %cst_32 {dimension_numbers = #tpu.dot_dimension_numbers<[1], [1], [0], [0], [0, 0, 1, 0], [], []>} : vector<8x8xf32>, vector<8x8xf32>, vector<8x8xf32> -> vector<8x8xf32>
    %cst_33 = arith.constant dense<0xFF800000> : vector<8xf32>
    %60 = vector.multi_reduction <maximumf>, %59, %cst_33 [1] : vector<8x8xf32> to vector<8xf32>
    %61 = vector.shape_cast %60 : vector<8xf32> to vector<8x1xf32>
    %62 = vector.broadcast %61 : vector<8x1xf32> to vector<8x8xf32>
    %63 = arith.subf %59, %62 : vector<8x8xf32>
    %64 = math.exp %63 : vector<8x8xf32>
    %cst_34 = arith.constant dense<0.000000e+00> : vector<8xf32>
    %65 = vector.multi_reduction <add>, %64, %cst_34 [1] : vector<8x8xf32> to vector<8xf32>
    %66 = vector.shape_cast %65 : vector<8xf32> to vector<8x1xf32>
    %67 = tpu.reciprocal %66 {approx = true} : vector<8x1xf32> -> vector<8x1xf32>
    %68 = arith.mulf %66, %67 : vector<8x1xf32>
    %cst_35 = arith.constant 2.000000e+00 : f32
    %69 = vector.broadcast %cst_35 : f32 to vector<8x1xf32>
    %70 = arith.subf %69, %68 : vector<8x1xf32>
    %71 = arith.mulf %67, %70 : vector<8x1xf32>
    %72 = vector.broadcast %71 : vector<8x1xf32> to vector<8x8xf32>
    %73 = arith.mulf %64, %72 : vector<8x8xf32>
    %cst_36 = arith.constant dense<0.000000e+00> : vector<8x8xf32>
    %74 = tpu.matmul %73, %58, %cst_36 {dimension_numbers = #tpu.dot_dimension_numbers<[1], [0], [0], [1], [0, 0, 1, 1], [], []>} : vector<8x8xf32>, vector<8x8xf32>, vector<8x8xf32> -> vector<8x8xf32>
    %75 = vector.extract_strided_slice %53 {offsets = [0, 8], sizes = [8, 8], strides = [1, 1]} : vector<8x32xf32> to vector<8x8xf32>
    %76 = vector.extract_strided_slice %54 {offsets = [0, 8], sizes = [8, 8], strides = [1, 1]} : vector<8x32xf32> to vector<8x8xf32>
    %77 = vector.extract_strided_slice %55 {offsets = [0, 8], sizes = [8, 8], strides = [1, 1]} : vector<8x32xf32> to vector<8x8xf32>
    %cst_37 = arith.constant dense<0.000000e+00> : vector<8x8xf32>
    %78 = tpu.matmul %75, %76, %cst_37 {dimension_numbers = #tpu.dot_dimension_numbers<[1], [1], [0], [0], [0, 0, 1, 0], [], []>} : vector<8x8xf32>, vector<8x8xf32>, vector<8x8xf32> -> vector<8x8xf32>
    %cst_38 = arith.constant dense<0xFF800000> : vector<8xf32>
    %79 = vector.multi_reduction <maximumf>, %78, %cst_38 [1] : vector<8x8xf32> to vector<8xf32>
    %80 = vector.shape_cast %79 : vector<8xf32> to vector<8x1xf32>
    %81 = vector.broadcast %80 : vector<8x1xf32> to vector<8x8xf32>
    %82 = arith.subf %78, %81 : vector<8x8xf32>
    %83 = math.exp %82 : vector<8x8xf32>
    %cst_39 = arith.constant dense<0.000000e+00> : vector<8xf32>
    %84 = vector.multi_reduction <add>, %83, %cst_39 [1] : vector<8x8xf32> to vector<8xf32>
    %85 = vector.shape_cast %84 : vector<8xf32> to vector<8x1xf32>
    %86 = tpu.reciprocal %85 {approx = true} : vector<8x1xf32> -> vector<8x1xf32>
    %87 = arith.mulf %85, %86 : vector<8x1xf32>
    %cst_40 = arith.constant 2.000000e+00 : f32
    %88 = vector.broadcast %cst_40 : f32 to vector<8x1xf32>
    %89 = arith.subf %88, %87 : vector<8x1xf32>
    %90 = arith.mulf %86, %89 : vector<8x1xf32>
    %91 = vector.broadcast %90 : vector<8x1xf32> to vector<8x8xf32>
    %92 = arith.mulf %83, %91 : vector<8x8xf32>
    %cst_41 = arith.constant dense<0.000000e+00> : vector<8x8xf32>
    %93 = tpu.matmul %92, %77, %cst_41 {dimension_numbers = #tpu.dot_dimension_numbers<[1], [0], [0], [1], [0, 0, 1, 1], [], []>} : vector<8x8xf32>, vector<8x8xf32>, vector<8x8xf32> -> vector<8x8xf32>
    %94 = vector.extract_strided_slice %53 {offsets = [0, 16], sizes = [8, 8], strides = [1, 1]} : vector<8x32xf32> to vector<8x8xf32>
    %95 = vector.extract_strided_slice %54 {offsets = [0, 16], sizes = [8, 8], strides = [1, 1]} : vector<8x32xf32> to vector<8x8xf32>
    %96 = vector.extract_strided_slice %55 {offsets = [0, 16], sizes = [8, 8], strides = [1, 1]} : vector<8x32xf32> to vector<8x8xf32>
    %cst_42 = arith.constant dense<0.000000e+00> : vector<8x8xf32>
    %97 = tpu.matmul %94, %95, %cst_42 {dimension_numbers = #tpu.dot_dimension_numbers<[1], [1], [0], [0], [0, 0, 1, 0], [], []>} : vector<8x8xf32>, vector<8x8xf32>, vector<8x8xf32> -> vector<8x8xf32>
    %cst_43 = arith.constant dense<0xFF800000> : vector<8xf32>
    %98 = vector.multi_reduction <maximumf>, %97, %cst_43 [1] : vector<8x8xf32> to vector<8xf32>
    %99 = vector.shape_cast %98 : vector<8xf32> to vector<8x1xf32>
    %100 = vector.broadcast %99 : vector<8x1xf32> to vector<8x8xf32>
    %101 = arith.subf %97, %100 : vector<8x8xf32>
    %102 = math.exp %101 : vector<8x8xf32>
    %cst_44 = arith.constant dense<0.000000e+00> : vector<8xf32>
    %103 = vector.multi_reduction <add>, %102, %cst_44 [1] : vector<8x8xf32> to vector<8xf32>
    %104 = vector.shape_cast %103 : vector<8xf32> to vector<8x1xf32>
    %105 = tpu.reciprocal %104 {approx = true} : vector<8x1xf32> -> vector<8x1xf32>
    %106 = arith.mulf %104, %105 : vector<8x1xf32>
    %cst_45 = arith.constant 2.000000e+00 : f32
    %107 = vector.broadcast %cst_45 : f32 to vector<8x1xf32>
    %108 = arith.subf %107, %106 : vector<8x1xf32>
    %109 = arith.mulf %105, %108 : vector<8x1xf32>
    %110 = vector.broadcast %109 : vector<8x1xf32> to vector<8x8xf32>
    %111 = arith.mulf %102, %110 : vector<8x8xf32>
    %cst_46 = arith.constant dense<0.000000e+00> : vector<8x8xf32>
    %112 = tpu.matmul %111, %96, %cst_46 {dimension_numbers = #tpu.dot_dimension_numbers<[1], [0], [0], [1], [0, 0, 1, 1], [], []>} : vector<8x8xf32>, vector<8x8xf32>, vector<8x8xf32> -> vector<8x8xf32>
    %113 = vector.extract_strided_slice %53 {offsets = [0, 24], sizes = [8, 8], strides = [1, 1]} : vector<8x32xf32> to vector<8x8xf32>
    %114 = vector.extract_strided_slice %54 {offsets = [0, 24], sizes = [8, 8], strides = [1, 1]} : vector<8x32xf32> to vector<8x8xf32>
    %115 = vector.extract_strided_slice %55 {offsets = [0, 24], sizes = [8, 8], strides = [1, 1]} : vector<8x32xf32> to vector<8x8xf32>
    %cst_47 = arith.constant dense<0.000000e+00> : vector<8x8xf32>
    %116 = tpu.matmul %113, %114, %cst_47 {dimension_numbers = #tpu.dot_dimension_numbers<[1], [1], [0], [0], [0, 0, 1, 0], [], []>} : vector<8x8xf32>, vector<8x8xf32>, vector<8x8xf32> -> vector<8x8xf32>
    %cst_48 = arith.constant dense<0xFF800000> : vector<8xf32>
    %117 = vector.multi_reduction <maximumf>, %116, %cst_48 [1] : vector<8x8xf32> to vector<8xf32>
    %118 = vector.shape_cast %117 : vector<8xf32> to vector<8x1xf32>
    %119 = vector.broadcast %118 : vector<8x1xf32> to vector<8x8xf32>
    %120 = arith.subf %116, %119 : vector<8x8xf32>
    %121 = math.exp %120 : vector<8x8xf32>
    %cst_49 = arith.constant dense<0.000000e+00> : vector<8xf32>
    %122 = vector.multi_reduction <add>, %121, %cst_49 [1] : vector<8x8xf32> to vector<8xf32>
    %123 = vector.shape_cast %122 : vector<8xf32> to vector<8x1xf32>
    %124 = tpu.reciprocal %123 {approx = true} : vector<8x1xf32> -> vector<8x1xf32>
    %125 = arith.mulf %123, %124 : vector<8x1xf32>
    %cst_50 = arith.constant 2.000000e+00 : f32
    %126 = vector.broadcast %cst_50 : f32 to vector<8x1xf32>
    %127 = arith.subf %126, %125 : vector<8x1xf32>
    %128 = arith.mulf %124, %127 : vector<8x1xf32>
    %129 = vector.broadcast %128 : vector<8x1xf32> to vector<8x8xf32>
    %130 = arith.mulf %121, %129 : vector<8x8xf32>
    %cst_51 = arith.constant dense<0.000000e+00> : vector<8x8xf32>
    %131 = tpu.matmul %130, %115, %cst_51 {dimension_numbers = #tpu.dot_dimension_numbers<[1], [0], [0], [1], [0, 0, 1, 1], [], []>} : vector<8x8xf32>, vector<8x8xf32>, vector<8x8xf32> -> vector<8x8xf32>
    %132 = tpu.concatenate %74, %93, %112, %131 in 1 : vector<8x8xf32>, vector<8x8xf32>, vector<8x8xf32>, vector<8x8xf32> -> vector<8x32xf32>
    %cst_52 = arith.constant dense<0.000000e+00> : vector<8x32xf32>
    %133 = tpu.matmul %132, %8, %cst_52 {dimension_numbers = #tpu.dot_dimension_numbers<[1], [0], [0], [1], [0, 0, 1, 1], [], []>} : vector<8x32xf32>, vector<32x32xf32>, vector<8x32xf32> -> vector<8x32xf32>
    %134 = arith.addf %0, %133 : vector<8x32xf32>
    %135 = vector.shape_cast %20 : vector<32xf32> to vector<1x32xf32>
    %136 = vector.broadcast %135 : vector<1x32xf32> to vector<8x32xf32>
    %137 = arith.addf %134, %136 : vector<8x32xf32>
    %cst_53 = arith.constant dense<0.000000e+00> : vector<8xf32>
    %138 = vector.multi_reduction <add>, %137, %cst_53 [1] : vector<8x32xf32> to vector<8xf32>
    %139 = vector.shape_cast %138 : vector<8xf32> to vector<8x1xf32>
    %cst_54 = arith.constant 3.200000e+01 : f32
    %140 = vector.broadcast %cst_54 : f32 to vector<8x1xf32>
    %141 = arith.divf %139, %140 : vector<8x1xf32>
    %142 = vector.broadcast %141 : vector<8x1xf32> to vector<8x32xf32>
    %143 = arith.subf %137, %142 : vector<8x32xf32>
    %144 = arith.mulf %143, %143 : vector<8x32xf32>
    %cst_55 = arith.constant dense<0.000000e+00> : vector<8xf32>
    %145 = vector.multi_reduction <add>, %144, %cst_55 [1] : vector<8x32xf32> to vector<8xf32>
    %146 = vector.shape_cast %145 : vector<8xf32> to vector<8x1xf32>
    %cst_56 = arith.constant 3.200000e+01 : f32
    %147 = vector.broadcast %cst_56 : f32 to vector<8x1xf32>
    %148 = arith.divf %146, %147 : vector<8x1xf32>
    %cst_57 = arith.constant 9.99999974E-6 : f32
    %149 = vector.broadcast %cst_57 : f32 to vector<8x1xf32>
    %150 = arith.addf %148, %149 : vector<8x1xf32>
    %151 = math.rsqrt %150 : vector<8x1xf32>
    %152 = vector.broadcast %151 : vector<8x1xf32> to vector<8x32xf32>
    %153 = arith.mulf %143, %152 : vector<8x32xf32>
    %154 = vector.shape_cast %22 : vector<32xf32> to vector<1x32xf32>
    %155 = vector.broadcast %154 : vector<1x32xf32> to vector<8x32xf32>
    %156 = arith.mulf %153, %155 : vector<8x32xf32>
    %157 = vector.shape_cast %24 : vector<32xf32> to vector<1x32xf32>
    %158 = vector.broadcast %157 : vector<1x32xf32> to vector<8x32xf32>
    %159 = arith.addf %156, %158 : vector<8x32xf32>
    %cst_58 = arith.constant dense<0.000000e+00> : vector<8x64xf32>
    %160 = tpu.matmul %159, %10, %cst_58 {dimension_numbers = #tpu.dot_dimension_numbers<[1], [0], [0], [1], [0, 0, 1, 1], [], []>} : vector<8x32xf32>, vector<32x64xf32>, vector<8x64xf32> -> vector<8x64xf32>
    %161 = vector.shape_cast %28 : vector<64xf32> to vector<1x64xf32>
    %162 = vector.broadcast %161 : vector<1x64xf32> to vector<8x64xf32>
    %163 = arith.addf %160, %162 : vector<8x64xf32>
    %cst_59 = arith.constant 5.000000e-01 : f32
    %164 = vector.broadcast %cst_59 : f32 to vector<8x64xf32>
    %165 = arith.mulf %164, %163 : vector<8x64xf32>
    %cst_60 = arith.constant 0.707106769 : f32
    %166 = vector.broadcast %cst_60 : f32 to vector<8x64xf32>
    %167 = arith.mulf %163, %166 : vector<8x64xf32>
    %168 = math.erf %167 : vector<8x64xf32>
    %cst_61 = arith.constant 1.000000e+00 : f32
    %169 = vector.broadcast %cst_61 : f32 to vector<8x64xf32>
    %170 = arith.addf %169, %168 : vector<8x64xf32>
    %171 = arith.mulf %165, %170 : vector<8x64xf32>
    %cst_62 = arith.constant dense<0.000000e+00> : vector<8x32xf32>
    %172 = tpu.matmul %171, %12, %cst_62 {dimension_numbers = #tpu.dot_dimension_numbers<[1], [0], [0], [1], [0, 0, 1, 1], [], []>} : vector<8x64xf32>, vector<64x32xf32>, vector<8x32xf32> -> vector<8x32xf32>
    %173 = arith.addf %137, %172 : vector<8x32xf32>
    %174 = vector.shape_cast %26 : vector<32xf32> to vector<1x32xf32>
    %175 = vector.broadcast %174 : vector<1x32xf32> to vector<8x32xf32>
    %176 = arith.addf %173, %175 : vector<8x32xf32>
    %c1 = arith.constant 1 : index
    %c0_63 = arith.constant 0 : index
    %c0_64 = arith.constant 0 : index
    %177 = vector.load %arg2[%c1, %c0_63, %c0_64] : memref<2x32x32xf32, #tpu.memory_space<vmem>>, vector<1x32x32xf32>
    %178 = vector.shape_cast %177 : vector<1x32x32xf32> to vector<32x32xf32>
    %c1_65 = arith.constant 1 : index
    %c0_66 = arith.constant 0 : index
    %c0_67 = arith.constant 0 : index
    %179 = vector.load %arg3[%c1_65, %c0_66, %c0_67] : memref<2x32x32xf32, #tpu.memory_space<vmem>>, vector<1x32x32xf32>
    %180 = vector.shape_cast %179 : vector<1x32x32xf32> to vector<32x32xf32>
    %c1_68 = arith.constant 1 : index
    %c0_69 = arith.constant 0 : index
    %c0_70 = arith.constant 0 : index
    %181 = vector.load %arg4[%c1_68, %c0_69, %c0_70] : memref<2x32x32xf32, #tpu.memory_space<vmem>>, vector<1x32x32xf32>
    %182 = vector.shape_cast %181 : vector<1x32x32xf32> to vector<32x32xf32>
    %c1_71 = arith.constant 1 : index
    %c0_72 = arith.constant 0 : index
    %c0_73 = arith.constant 0 : index
    %183 = vector.load %arg5[%c1_71, %c0_72, %c0_73] : memref<2x32x32xf32, #tpu.memory_space<vmem>>, vector<1x32x32xf32>
    %184 = vector.shape_cast %183 : vector<1x32x32xf32> to vector<32x32xf32>
    %c1_74 = arith.constant 1 : index
    %c0_75 = arith.constant 0 : index
    %c0_76 = arith.constant 0 : index
    %185 = vector.load %arg6[%c1_74, %c0_75, %c0_76] : memref<2x32x64xf32, #tpu.memory_space<vmem>>, vector<1x32x64xf32>
    %186 = vector.shape_cast %185 : vector<1x32x64xf32> to vector<32x64xf32>
    %c1_77 = arith.constant 1 : index
    %c0_78 = arith.constant 0 : index
    %c0_79 = arith.constant 0 : index
    %187 = vector.load %arg7[%c1_77, %c0_78, %c0_79] : memref<2x64x32xf32, #tpu.memory_space<vmem>>, vector<1x64x32xf32>
    %188 = vector.shape_cast %187 : vector<1x64x32xf32> to vector<64x32xf32>
    %c1_80 = arith.constant 1 : index
    %c0_81 = arith.constant 0 : index
    %c0_82 = arith.constant 0 : index
    %189 = vector.load %arg8[%c1_80, %c0_81, %c0_82] : memref<2x6x32xf32, #tpu.memory_space<vmem>>, vector<1x6x32xf32>
    %190 = vector.shape_cast %189 : vector<1x6x32xf32> to vector<6x32xf32>
    %191 = vector.extract_strided_slice %190 {offsets = [0, 0], sizes = [1, 32], strides = [1, 1]} : vector<6x32xf32> to vector<1x32xf32>
    %192 = vector.shape_cast %191 : vector<1x32xf32> to vector<32xf32>
    %193 = vector.extract_strided_slice %190 {offsets = [1, 0], sizes = [1, 32], strides = [1, 1]} : vector<6x32xf32> to vector<1x32xf32>
    %194 = vector.shape_cast %193 : vector<1x32xf32> to vector<32xf32>
    %195 = vector.extract_strided_slice %190 {offsets = [2, 0], sizes = [1, 32], strides = [1, 1]} : vector<6x32xf32> to vector<1x32xf32>
    %196 = vector.shape_cast %195 : vector<1x32xf32> to vector<32xf32>
    %197 = vector.extract_strided_slice %190 {offsets = [3, 0], sizes = [1, 32], strides = [1, 1]} : vector<6x32xf32> to vector<1x32xf32>
    %198 = vector.shape_cast %197 : vector<1x32xf32> to vector<32xf32>
    %199 = vector.extract_strided_slice %190 {offsets = [4, 0], sizes = [1, 32], strides = [1, 1]} : vector<6x32xf32> to vector<1x32xf32>
    %200 = vector.shape_cast %199 : vector<1x32xf32> to vector<32xf32>
    %201 = vector.extract_strided_slice %190 {offsets = [5, 0], sizes = [1, 32], strides = [1, 1]} : vector<6x32xf32> to vector<1x32xf32>
    %202 = vector.shape_cast %201 : vector<1x32xf32> to vector<32xf32>
    %c1_83 = arith.constant 1 : index
    %c0_84 = arith.constant 0 : index
    %203 = vector.load %arg9[%c1_83, %c0_84] : memref<2x64xf32, #tpu.memory_space<vmem>>, vector<1x64xf32>
    %204 = vector.shape_cast %203 : vector<1x64xf32> to vector<64xf32>
    %cst_85 = arith.constant dense<0.000000e+00> : vector<8xf32>
    %205 = vector.multi_reduction <add>, %176, %cst_85 [1] : vector<8x32xf32> to vector<8xf32>
    %206 = vector.shape_cast %205 : vector<8xf32> to vector<8x1xf32>
    %cst_86 = arith.constant 3.200000e+01 : f32
    %207 = vector.broadcast %cst_86 : f32 to vector<8x1xf32>
    %208 = arith.divf %206, %207 : vector<8x1xf32>
    %209 = vector.broadcast %208 : vector<8x1xf32> to vector<8x32xf32>
    %210 = arith.subf %176, %209 : vector<8x32xf32>
    %211 = arith.mulf %210, %210 : vector<8x32xf32>
    %cst_87 = arith.constant dense<0.000000e+00> : vector<8xf32>
    %212 = vector.multi_reduction <add>, %211, %cst_87 [1] : vector<8x32xf32> to vector<8xf32>
    %213 = vector.shape_cast %212 : vector<8xf32> to vector<8x1xf32>
    %cst_88 = arith.constant 3.200000e+01 : f32
    %214 = vector.broadcast %cst_88 : f32 to vector<8x1xf32>
    %215 = arith.divf %213, %214 : vector<8x1xf32>
    %cst_89 = arith.constant 9.99999974E-6 : f32
    %216 = vector.broadcast %cst_89 : f32 to vector<8x1xf32>
    %217 = arith.addf %215, %216 : vector<8x1xf32>
    %218 = math.rsqrt %217 : vector<8x1xf32>
    %219 = vector.broadcast %218 : vector<8x1xf32> to vector<8x32xf32>
    %220 = arith.mulf %210, %219 : vector<8x32xf32>
    %221 = vector.shape_cast %192 : vector<32xf32> to vector<1x32xf32>
    %222 = vector.broadcast %221 : vector<1x32xf32> to vector<8x32xf32>
    %223 = arith.mulf %220, %222 : vector<8x32xf32>
    %224 = vector.shape_cast %194 : vector<32xf32> to vector<1x32xf32>
    %225 = vector.broadcast %224 : vector<1x32xf32> to vector<8x32xf32>
    %226 = arith.addf %223, %225 : vector<8x32xf32>
    %cst_90 = arith.constant dense<0.000000e+00> : vector<8x32xf32>
    %227 = tpu.matmul %226, %178, %cst_90 {dimension_numbers = #tpu.dot_dimension_numbers<[1], [0], [0], [1], [0, 0, 1, 1], [], []>} : vector<8x32xf32>, vector<32x32xf32>, vector<8x32xf32> -> vector<8x32xf32>
    %cst_91 = arith.constant 0.353553385 : f32
    %228 = vector.broadcast %cst_91 : f32 to vector<8x32xf32>
    %229 = arith.mulf %227, %228 : vector<8x32xf32>
    %cst_92 = arith.constant dense<0.000000e+00> : vector<8x32xf32>
    %230 = tpu.matmul %226, %180, %cst_92 {dimension_numbers = #tpu.dot_dimension_numbers<[1], [0], [0], [1], [0, 0, 1, 1], [], []>} : vector<8x32xf32>, vector<32x32xf32>, vector<8x32xf32> -> vector<8x32xf32>
    %cst_93 = arith.constant dense<0.000000e+00> : vector<8x32xf32>
    %231 = tpu.matmul %226, %182, %cst_93 {dimension_numbers = #tpu.dot_dimension_numbers<[1], [0], [0], [1], [0, 0, 1, 1], [], []>} : vector<8x32xf32>, vector<32x32xf32>, vector<8x32xf32> -> vector<8x32xf32>
    %232 = vector.extract_strided_slice %229 {offsets = [0, 0], sizes = [8, 8], strides = [1, 1]} : vector<8x32xf32> to vector<8x8xf32>
    %233 = vector.extract_strided_slice %230 {offsets = [0, 0], sizes = [8, 8], strides = [1, 1]} : vector<8x32xf32> to vector<8x8xf32>
    %234 = vector.extract_strided_slice %231 {offsets = [0, 0], sizes = [8, 8], strides = [1, 1]} : vector<8x32xf32> to vector<8x8xf32>
    %cst_94 = arith.constant dense<0.000000e+00> : vector<8x8xf32>
    %235 = tpu.matmul %232, %233, %cst_94 {dimension_numbers = #tpu.dot_dimension_numbers<[1], [1], [0], [0], [0, 0, 1, 0], [], []>} : vector<8x8xf32>, vector<8x8xf32>, vector<8x8xf32> -> vector<8x8xf32>
    %cst_95 = arith.constant dense<0xFF800000> : vector<8xf32>
    %236 = vector.multi_reduction <maximumf>, %235, %cst_95 [1] : vector<8x8xf32> to vector<8xf32>
    %237 = vector.shape_cast %236 : vector<8xf32> to vector<8x1xf32>
    %238 = vector.broadcast %237 : vector<8x1xf32> to vector<8x8xf32>
    %239 = arith.subf %235, %238 : vector<8x8xf32>
    %240 = math.exp %239 : vector<8x8xf32>
    %cst_96 = arith.constant dense<0.000000e+00> : vector<8xf32>
    %241 = vector.multi_reduction <add>, %240, %cst_96 [1] : vector<8x8xf32> to vector<8xf32>
    %242 = vector.shape_cast %241 : vector<8xf32> to vector<8x1xf32>
    %243 = tpu.reciprocal %242 {approx = true} : vector<8x1xf32> -> vector<8x1xf32>
    %244 = arith.mulf %242, %243 : vector<8x1xf32>
    %cst_97 = arith.constant 2.000000e+00 : f32
    %245 = vector.broadcast %cst_97 : f32 to vector<8x1xf32>
    %246 = arith.subf %245, %244 : vector<8x1xf32>
    %247 = arith.mulf %243, %246 : vector<8x1xf32>
    %248 = vector.broadcast %247 : vector<8x1xf32> to vector<8x8xf32>
    %249 = arith.mulf %240, %248 : vector<8x8xf32>
    %cst_98 = arith.constant dense<0.000000e+00> : vector<8x8xf32>
    %250 = tpu.matmul %249, %234, %cst_98 {dimension_numbers = #tpu.dot_dimension_numbers<[1], [0], [0], [1], [0, 0, 1, 1], [], []>} : vector<8x8xf32>, vector<8x8xf32>, vector<8x8xf32> -> vector<8x8xf32>
    %251 = vector.extract_strided_slice %229 {offsets = [0, 8], sizes = [8, 8], strides = [1, 1]} : vector<8x32xf32> to vector<8x8xf32>
    %252 = vector.extract_strided_slice %230 {offsets = [0, 8], sizes = [8, 8], strides = [1, 1]} : vector<8x32xf32> to vector<8x8xf32>
    %253 = vector.extract_strided_slice %231 {offsets = [0, 8], sizes = [8, 8], strides = [1, 1]} : vector<8x32xf32> to vector<8x8xf32>
    %cst_99 = arith.constant dense<0.000000e+00> : vector<8x8xf32>
    %254 = tpu.matmul %251, %252, %cst_99 {dimension_numbers = #tpu.dot_dimension_numbers<[1], [1], [0], [0], [0, 0, 1, 0], [], []>} : vector<8x8xf32>, vector<8x8xf32>, vector<8x8xf32> -> vector<8x8xf32>
    %cst_100 = arith.constant dense<0xFF800000> : vector<8xf32>
    %255 = vector.multi_reduction <maximumf>, %254, %cst_100 [1] : vector<8x8xf32> to vector<8xf32>
    %256 = vector.shape_cast %255 : vector<8xf32> to vector<8x1xf32>
    %257 = vector.broadcast %256 : vector<8x1xf32> to vector<8x8xf32>
    %258 = arith.subf %254, %257 : vector<8x8xf32>
    %259 = math.exp %258 : vector<8x8xf32>
    %cst_101 = arith.constant dense<0.000000e+00> : vector<8xf32>
    %260 = vector.multi_reduction <add>, %259, %cst_101 [1] : vector<8x8xf32> to vector<8xf32>
    %261 = vector.shape_cast %260 : vector<8xf32> to vector<8x1xf32>
    %262 = tpu.reciprocal %261 {approx = true} : vector<8x1xf32> -> vector<8x1xf32>
    %263 = arith.mulf %261, %262 : vector<8x1xf32>
    %cst_102 = arith.constant 2.000000e+00 : f32
    %264 = vector.broadcast %cst_102 : f32 to vector<8x1xf32>
    %265 = arith.subf %264, %263 : vector<8x1xf32>
    %266 = arith.mulf %262, %265 : vector<8x1xf32>
    %267 = vector.broadcast %266 : vector<8x1xf32> to vector<8x8xf32>
    %268 = arith.mulf %259, %267 : vector<8x8xf32>
    %cst_103 = arith.constant dense<0.000000e+00> : vector<8x8xf32>
    %269 = tpu.matmul %268, %253, %cst_103 {dimension_numbers = #tpu.dot_dimension_numbers<[1], [0], [0], [1], [0, 0, 1, 1], [], []>} : vector<8x8xf32>, vector<8x8xf32>, vector<8x8xf32> -> vector<8x8xf32>
    %270 = vector.extract_strided_slice %229 {offsets = [0, 16], sizes = [8, 8], strides = [1, 1]} : vector<8x32xf32> to vector<8x8xf32>
    %271 = vector.extract_strided_slice %230 {offsets = [0, 16], sizes = [8, 8], strides = [1, 1]} : vector<8x32xf32> to vector<8x8xf32>
    %272 = vector.extract_strided_slice %231 {offsets = [0, 16], sizes = [8, 8], strides = [1, 1]} : vector<8x32xf32> to vector<8x8xf32>
    %cst_104 = arith.constant dense<0.000000e+00> : vector<8x8xf32>
    %273 = tpu.matmul %270, %271, %cst_104 {dimension_numbers = #tpu.dot_dimension_numbers<[1], [1], [0], [0], [0, 0, 1, 0], [], []>} : vector<8x8xf32>, vector<8x8xf32>, vector<8x8xf32> -> vector<8x8xf32>
    %cst_105 = arith.constant dense<0xFF800000> : vector<8xf32>
    %274 = vector.multi_reduction <maximumf>, %273, %cst_105 [1] : vector<8x8xf32> to vector<8xf32>
    %275 = vector.shape_cast %274 : vector<8xf32> to vector<8x1xf32>
    %276 = vector.broadcast %275 : vector<8x1xf32> to vector<8x8xf32>
    %277 = arith.subf %273, %276 : vector<8x8xf32>
    %278 = math.exp %277 : vector<8x8xf32>
    %cst_106 = arith.constant dense<0.000000e+00> : vector<8xf32>
    %279 = vector.multi_reduction <add>, %278, %cst_106 [1] : vector<8x8xf32> to vector<8xf32>
    %280 = vector.shape_cast %279 : vector<8xf32> to vector<8x1xf32>
    %281 = tpu.reciprocal %280 {approx = true} : vector<8x1xf32> -> vector<8x1xf32>
    %282 = arith.mulf %280, %281 : vector<8x1xf32>
    %cst_107 = arith.constant 2.000000e+00 : f32
    %283 = vector.broadcast %cst_107 : f32 to vector<8x1xf32>
    %284 = arith.subf %283, %282 : vector<8x1xf32>
    %285 = arith.mulf %281, %284 : vector<8x1xf32>
    %286 = vector.broadcast %285 : vector<8x1xf32> to vector<8x8xf32>
    %287 = arith.mulf %278, %286 : vector<8x8xf32>
    %cst_108 = arith.constant dense<0.000000e+00> : vector<8x8xf32>
    %288 = tpu.matmul %287, %272, %cst_108 {dimension_numbers = #tpu.dot_dimension_numbers<[1], [0], [0], [1], [0, 0, 1, 1], [], []>} : vector<8x8xf32>, vector<8x8xf32>, vector<8x8xf32> -> vector<8x8xf32>
    %289 = vector.extract_strided_slice %229 {offsets = [0, 24], sizes = [8, 8], strides = [1, 1]} : vector<8x32xf32> to vector<8x8xf32>
    %290 = vector.extract_strided_slice %230 {offsets = [0, 24], sizes = [8, 8], strides = [1, 1]} : vector<8x32xf32> to vector<8x8xf32>
    %291 = vector.extract_strided_slice %231 {offsets = [0, 24], sizes = [8, 8], strides = [1, 1]} : vector<8x32xf32> to vector<8x8xf32>
    %cst_109 = arith.constant dense<0.000000e+00> : vector<8x8xf32>
    %292 = tpu.matmul %289, %290, %cst_109 {dimension_numbers = #tpu.dot_dimension_numbers<[1], [1], [0], [0], [0, 0, 1, 0], [], []>} : vector<8x8xf32>, vector<8x8xf32>, vector<8x8xf32> -> vector<8x8xf32>
    %cst_110 = arith.constant dense<0xFF800000> : vector<8xf32>
    %293 = vector.multi_reduction <maximumf>, %292, %cst_110 [1] : vector<8x8xf32> to vector<8xf32>
    %294 = vector.shape_cast %293 : vector<8xf32> to vector<8x1xf32>
    %295 = vector.broadcast %294 : vector<8x1xf32> to vector<8x8xf32>
    %296 = arith.subf %292, %295 : vector<8x8xf32>
    %297 = math.exp %296 : vector<8x8xf32>
    %cst_111 = arith.constant dense<0.000000e+00> : vector<8xf32>
    %298 = vector.multi_reduction <add>, %297, %cst_111 [1] : vector<8x8xf32> to vector<8xf32>
    %299 = vector.shape_cast %298 : vector<8xf32> to vector<8x1xf32>
    %300 = tpu.reciprocal %299 {approx = true} : vector<8x1xf32> -> vector<8x1xf32>
    %301 = arith.mulf %299, %300 : vector<8x1xf32>
    %cst_112 = arith.constant 2.000000e+00 : f32
    %302 = vector.broadcast %cst_112 : f32 to vector<8x1xf32>
    %303 = arith.subf %302, %301 : vector<8x1xf32>
    %304 = arith.mulf %300, %303 : vector<8x1xf32>
    %305 = vector.broadcast %304 : vector<8x1xf32> to vector<8x8xf32>
    %306 = arith.mulf %297, %305 : vector<8x8xf32>
    %cst_113 = arith.constant dense<0.000000e+00> : vector<8x8xf32>
    %307 = tpu.matmul %306, %291, %cst_113 {dimension_numbers = #tpu.dot_dimension_numbers<[1], [0], [0], [1], [0, 0, 1, 1], [], []>} : vector<8x8xf32>, vector<8x8xf32>, vector<8x8xf32> -> vector<8x8xf32>
    %308 = tpu.concatenate %250, %269, %288, %307 in 1 : vector<8x8xf32>, vector<8x8xf32>, vector<8x8xf32>, vector<8x8xf32> -> vector<8x32xf32>
    %cst_114 = arith.constant dense<0.000000e+00> : vector<8x32xf32>
    %309 = tpu.matmul %308, %184, %cst_114 {dimension_numbers = #tpu.dot_dimension_numbers<[1], [0], [0], [1], [0, 0, 1, 1], [], []>} : vector<8x32xf32>, vector<32x32xf32>, vector<8x32xf32> -> vector<8x32xf32>
    %310 = arith.addf %176, %309 : vector<8x32xf32>
    %311 = vector.shape_cast %196 : vector<32xf32> to vector<1x32xf32>
    %312 = vector.broadcast %311 : vector<1x32xf32> to vector<8x32xf32>
    %313 = arith.addf %310, %312 : vector<8x32xf32>
    %cst_115 = arith.constant dense<0.000000e+00> : vector<8xf32>
    %314 = vector.multi_reduction <add>, %313, %cst_115 [1] : vector<8x32xf32> to vector<8xf32>
    %315 = vector.shape_cast %314 : vector<8xf32> to vector<8x1xf32>
    %cst_116 = arith.constant 3.200000e+01 : f32
    %316 = vector.broadcast %cst_116 : f32 to vector<8x1xf32>
    %317 = arith.divf %315, %316 : vector<8x1xf32>
    %318 = vector.broadcast %317 : vector<8x1xf32> to vector<8x32xf32>
    %319 = arith.subf %313, %318 : vector<8x32xf32>
    %320 = arith.mulf %319, %319 : vector<8x32xf32>
    %cst_117 = arith.constant dense<0.000000e+00> : vector<8xf32>
    %321 = vector.multi_reduction <add>, %320, %cst_117 [1] : vector<8x32xf32> to vector<8xf32>
    %322 = vector.shape_cast %321 : vector<8xf32> to vector<8x1xf32>
    %cst_118 = arith.constant 3.200000e+01 : f32
    %323 = vector.broadcast %cst_118 : f32 to vector<8x1xf32>
    %324 = arith.divf %322, %323 : vector<8x1xf32>
    %cst_119 = arith.constant 9.99999974E-6 : f32
    %325 = vector.broadcast %cst_119 : f32 to vector<8x1xf32>
    %326 = arith.addf %324, %325 : vector<8x1xf32>
    %327 = math.rsqrt %326 : vector<8x1xf32>
    %328 = vector.broadcast %327 : vector<8x1xf32> to vector<8x32xf32>
    %329 = arith.mulf %319, %328 : vector<8x32xf32>
    %330 = vector.shape_cast %198 : vector<32xf32> to vector<1x32xf32>
    %331 = vector.broadcast %330 : vector<1x32xf32> to vector<8x32xf32>
    %332 = arith.mulf %329, %331 : vector<8x32xf32>
    %333 = vector.shape_cast %200 : vector<32xf32> to vector<1x32xf32>
    %334 = vector.broadcast %333 : vector<1x32xf32> to vector<8x32xf32>
    %335 = arith.addf %332, %334 : vector<8x32xf32>
    %cst_120 = arith.constant dense<0.000000e+00> : vector<8x64xf32>
    %336 = tpu.matmul %335, %186, %cst_120 {dimension_numbers = #tpu.dot_dimension_numbers<[1], [0], [0], [1], [0, 0, 1, 1], [], []>} : vector<8x32xf32>, vector<32x64xf32>, vector<8x64xf32> -> vector<8x64xf32>
    %337 = vector.shape_cast %204 : vector<64xf32> to vector<1x64xf32>
    %338 = vector.broadcast %337 : vector<1x64xf32> to vector<8x64xf32>
    %339 = arith.addf %336, %338 : vector<8x64xf32>
    %cst_121 = arith.constant 5.000000e-01 : f32
    %340 = vector.broadcast %cst_121 : f32 to vector<8x64xf32>
    %341 = arith.mulf %340, %339 : vector<8x64xf32>
    %cst_122 = arith.constant 0.707106769 : f32
    %342 = vector.broadcast %cst_122 : f32 to vector<8x64xf32>
    %343 = arith.mulf %339, %342 : vector<8x64xf32>
    %344 = math.erf %343 : vector<8x64xf32>
    %cst_123 = arith.constant 1.000000e+00 : f32
    %345 = vector.broadcast %cst_123 : f32 to vector<8x64xf32>
    %346 = arith.addf %345, %344 : vector<8x64xf32>
    %347 = arith.mulf %341, %346 : vector<8x64xf32>
    %cst_124 = arith.constant dense<0.000000e+00> : vector<8x32xf32>
    %348 = tpu.matmul %347, %188, %cst_124 {dimension_numbers = #tpu.dot_dimension_numbers<[1], [0], [0], [1], [0, 0, 1, 1], [], []>} : vector<8x64xf32>, vector<64x32xf32>, vector<8x32xf32> -> vector<8x32xf32>
    %349 = arith.addf %313, %348 : vector<8x32xf32>
    %350 = vector.shape_cast %202 : vector<32xf32> to vector<1x32xf32>
    %351 = vector.broadcast %350 : vector<1x32xf32> to vector<8x32xf32>
    %352 = arith.addf %349, %351 : vector<8x32xf32>
    %c0_125 = arith.constant 0 : index
    %c0_126 = arith.constant 0 : index
    %353 = vector.load %arg10[%c0_125, %c0_126] : memref<2x32xf32, #tpu.memory_space<vmem>>, vector<1x32xf32>
    %354 = vector.shape_cast %353 : vector<1x32xf32> to vector<32xf32>
    %c1_127 = arith.constant 1 : index
    %c0_128 = arith.constant 0 : index
    %355 = vector.load %arg10[%c1_127, %c0_128] : memref<2x32xf32, #tpu.memory_space<vmem>>, vector<1x32xf32>
    %356 = vector.shape_cast %355 : vector<1x32xf32> to vector<32xf32>
    %cst_129 = arith.constant dense<0.000000e+00> : vector<8xf32>
    %357 = vector.multi_reduction <add>, %352, %cst_129 [1] : vector<8x32xf32> to vector<8xf32>
    %358 = vector.shape_cast %357 : vector<8xf32> to vector<8x1xf32>
    %cst_130 = arith.constant 3.200000e+01 : f32
    %359 = vector.broadcast %cst_130 : f32 to vector<8x1xf32>
    %360 = arith.divf %358, %359 : vector<8x1xf32>
    %361 = vector.broadcast %360 : vector<8x1xf32> to vector<8x32xf32>
    %362 = arith.subf %352, %361 : vector<8x32xf32>
    %363 = arith.mulf %362, %362 : vector<8x32xf32>
    %cst_131 = arith.constant dense<0.000000e+00> : vector<8xf32>
    %364 = vector.multi_reduction <add>, %363, %cst_131 [1] : vector<8x32xf32> to vector<8xf32>
    %365 = vector.shape_cast %364 : vector<8xf32> to vector<8x1xf32>
    %cst_132 = arith.constant 3.200000e+01 : f32
    %366 = vector.broadcast %cst_132 : f32 to vector<8x1xf32>
    %367 = arith.divf %365, %366 : vector<8x1xf32>
    %cst_133 = arith.constant 9.99999974E-6 : f32
    %368 = vector.broadcast %cst_133 : f32 to vector<8x1xf32>
    %369 = arith.addf %367, %368 : vector<8x1xf32>
    %370 = math.rsqrt %369 : vector<8x1xf32>
    %371 = vector.broadcast %370 : vector<8x1xf32> to vector<8x32xf32>
    %372 = arith.mulf %362, %371 : vector<8x32xf32>
    %373 = vector.shape_cast %354 : vector<32xf32> to vector<1x32xf32>
    %374 = vector.broadcast %373 : vector<1x32xf32> to vector<8x32xf32>
    %375 = arith.mulf %372, %374 : vector<8x32xf32>
    %376 = vector.shape_cast %356 : vector<32xf32> to vector<1x32xf32>
    %377 = vector.broadcast %376 : vector<1x32xf32> to vector<8x32xf32>
    %378 = arith.addf %375, %377 : vector<8x32xf32>
    %c0_134 = arith.constant 0 : index
    %c0_135 = arith.constant 0 : index
    %379 = vector.load %arg11[%c0_134, %c0_135] : memref<8x32xf32, #tpu.memory_space<vmem>>, vector<8x32xf32>
    tpu.vector_store %arg11[%c0_134, %c0_135], %378 {strides = array<i32>} : memref<8x32xf32, #tpu.memory_space<vmem>>, vector<8x32xf32>,
    return
  }
  func.func @transform_0(%arg0: i32) -> (i32, i32) {
    %c0_i32 = arith.constant 0 : i32
    %c0_i32_0 = arith.constant 0 : i32
    return %arg0, %c0_i32 : i32, i32
  }
  func.func @transform_1(%arg0: i32) -> (i32, i32, i32) {
    %c0_i32 = arith.constant 0 : i32
    %c0_i32_0 = arith.constant 0 : i32
    %c0_i32_1 = arith.constant 0 : i32
    %c0_i32_2 = arith.constant 0 : i32
    return %c0_i32, %c0_i32_0, %c0_i32_1 : i32, i32, i32
  }
  func.func @transform_2(%arg0: i32) -> (i32, i32, i32) {
    %c0_i32 = arith.constant 0 : i32
    %c0_i32_0 = arith.constant 0 : i32
    %c0_i32_1 = arith.constant 0 : i32
    %c0_i32_2 = arith.constant 0 : i32
    return %c0_i32, %c0_i32_0, %c0_i32_1 : i32, i32, i32
  }
  func.func @transform_3(%arg0: i32) -> (i32, i32, i32) {
    %c0_i32 = arith.constant 0 : i32
    %c0_i32_0 = arith.constant 0 : i32
    %c0_i32_1 = arith.constant 0 : i32
    %c0_i32_2 = arith.constant 0 : i32
    return %c0_i32, %c0_i32_0, %c0_i32_1 : i32, i32, i32
  }
  func.func @transform_4(%arg0: i32) -> (i32, i32, i32) {
    %c0_i32 = arith.constant 0 : i32
    %c0_i32_0 = arith.constant 0 : i32
    %c0_i32_1 = arith.constant 0 : i32
    %c0_i32_2 = arith.constant 0 : i32
    return %c0_i32, %c0_i32_0, %c0_i32_1 : i32, i32, i32
  }
  func.func @transform_5(%arg0: i32) -> (i32, i32, i32) {
    %c0_i32 = arith.constant 0 : i32
    %c0_i32_0 = arith.constant 0 : i32
    %c0_i32_1 = arith.constant 0 : i32
    %c0_i32_2 = arith.constant 0 : i32
    return %c0_i32, %c0_i32_0, %c0_i32_1 : i32, i32, i32
  }
  func.func @transform_6(%arg0: i32) -> (i32, i32, i32) {
    %c0_i32 = arith.constant 0 : i32
    %c0_i32_0 = arith.constant 0 : i32
    %c0_i32_1 = arith.constant 0 : i32
    %c0_i32_2 = arith.constant 0 : i32
    return %c0_i32, %c0_i32_0, %c0_i32_1 : i32, i32, i32
  }
  func.func @transform_7(%arg0: i32) -> (i32, i32, i32) {
    %c0_i32 = arith.constant 0 : i32
    %c0_i32_0 = arith.constant 0 : i32
    %c0_i32_1 = arith.constant 0 : i32
    %c0_i32_2 = arith.constant 0 : i32
    return %c0_i32, %c0_i32_0, %c0_i32_1 : i32, i32, i32
  }
  func.func @transform_8(%arg0: i32) -> (i32, i32) {
    %c0_i32 = arith.constant 0 : i32
    %c0_i32_0 = arith.constant 0 : i32
    %c0_i32_1 = arith.constant 0 : i32
    return %c0_i32, %c0_i32_0 : i32, i32
  }
  func.func @transform_9(%arg0: i32) -> (i32, i32) {
    %c0_i32 = arith.constant 0 : i32
    %c0_i32_0 = arith.constant 0 : i32
    %c0_i32_1 = arith.constant 0 : i32
    return %c0_i32, %c0_i32_0 : i32, i32
  }
  func.func @transform_10(%arg0: i32) -> (i32, i32) {
    %c0_i32 = arith.constant 0 : i32
    %c0_i32_0 = arith.constant 0 : i32
    return %arg0, %c0_i32 : i32, i32
  }
}

</mosaic_0001>

<llo_original>
// kernel: transformer_forward.1
$region0: #{transformer_forward.1}
  #allocation0 [shape = 'u32[]', space=smem, size = 0x4, offset = 0x4, fixed_abs, tag = 'smem constant byte address 0x4 - core index']
  #allocation1 [shape = 'u32[72,128]{1,0:T(1,128)}', space=vmem, size = 0x9000, scoped, tag = 'internal scratch']
  %s0 = inlined_call_operand.vmem [shape: f32[16,32], index: 0, kind: input, shape index: {}]
  %s1 = inlined_call_operand.vmem [shape: f32[2,32,32], index: 1, kind: input, shape index: {}]
  %s2 = inlined_call_operand.vmem [shape: f32[2,32,32], index: 2, kind: input, shape index: {}]
  %s3 = inlined_call_operand.vmem [shape: f32[2,32,32], index: 3, kind: input, shape index: {}]
  %s4 = inlined_call_operand.hbm [shape: f32[2,32,32], index: 4, kind: input, shape index: {}]
  %s5 = inlined_call_operand.hbm [shape: f32[2,32,64], index: 5, kind: input, shape index: {}]
  %s6 = inlined_call_operand.vmem [shape: f32[2,64,32], index: 6, kind: input, shape index: {}]
  %s7 = inlined_call_operand.vmem [shape: f32[2,6,32], index: 7, kind: input, shape index: {}]
  %s8 = inlined_call_operand.vmem [shape: f32[2,64], index: 8, kind: input, shape index: {}]
  %s9 = inlined_call_operand.vmem [shape: f32[2,32], index: 9, kind: input, shape index: {}]
  %s10 = inlined_call_operand.hbm [shape: f32[16,32], index: 10, kind: output, shape index: {}]
  %s11 = sld [smem:[#allocation0]]
  $region81: #{transformer_forward.1} parent=0
    _
  %s13 = ssub.s32 1, %s11
  %s14 = scalar_select 0, %s13, %s11
  $region1: #{transformer_forward.1} parent=0
    #allocation2 [shape = 'u8[32768]{0}', space=vmem, size = 0x8000, scoped, tag = 'input window, operand 4, single buffered']
    #allocation3 [shape = 's32[2]{0}', space=sflag, size = 0x8, scoped, tag = 'scoped memory for transformer_forward.1']
    #allocation4 [shape = 's32[2]{0}', space=sflag, size = 0x8, scoped, tag = 'scoped memory for transformer_forward.1']
    #allocation5 [shape = 'u8[32768]{0}', space=vmem, size = 0x8000, scoped, tag = 'input window, operand 5, single buffered']
    #allocation6 [shape = 's32[1]{0}', space=sflag, size = 0x4, scoped, tag = 'scoped memory for transformer_forward.1']
    #allocation7 [shape = 'u8[8192]{0}', space=vmem, size = 0x2000, scoped, tag = 'output window, operand 0']
    %15 = vsyncpa [#allocation3], 0
    %16 = vsyncpa [#allocation6], 0
    %17 = vsyncpa [#allocation4], 0
    %s18 = scalar_lea.sflag [#allocation4], 1
    %19 = vsyncpa %s18, 0
    loop: start=0, step=1, limit=4
    $region2: #{transformer_forward.1} parent=1 // loop_pre_header
      _
    $region3: #{transformer_forward.1} parent=1 // loop_header
      %s21 = sphi 0, %s25
      %p22 = scmp.ge.s32.totalorder %s21, 4
      %s31 = sphi 0, %s33
      %s34 = sphi 0, %s31
      %s35 = sphi 0, %s34
      %s51 = sphi 0, %s35
      %s55 = sphi 0, %s55
      %s57 = sphi 0, %s55
      %s58 = sphi 0, %s57
      %s72 = sphi 0, %s58
      %s76 = sphi 0, %s76
      %s78 = sphi 0, %s76
      %s79 = sphi 0, %s78
      %s93 = sphi 0, %s79
      %s97 = sphi 0, %s97
      %s99 = sphi 0, %s97
      %s100 = sphi 0, %s99
      %s114 = sphi 0, %s100
      %s118 = sphi 0, %s118
      %s120 = sphi 0, %s118
      %s121 = sphi 0, %s120
      %s135 = sphi 0, %s121
      %s139 = sphi 0, %s139
      %s141 = sphi 0, %s139
      %s142 = sphi 0, %s141
      %s156 = sphi 0, %s142
      %s160 = sphi 0, %s160
      %s162 = sphi 0, %s160
      %s163 = sphi 0, %s162
      %s177 = sphi 0, %s163
      %s181 = sphi 0, %s181
      %s183 = sphi 0, %s181
      %s184 = sphi 0, %s183
      %s198 = sphi 0, %s184
      %s202 = sphi 0, %s202
      %s204 = sphi 0, %s202
      %s205 = sphi 0, %s204
      %s219 = sphi 0, %s205
      %s223 = sphi 0, %s223
      %s225 = sphi 0, %s223
      %s226 = sphi 0, %s225
      %s240 = sphi 0, %s226
      %s246 = sphi 0, %s248
      %s249 = sphi 0, %s246
      %s250 = sphi 0, %s249
      %s266 = sphi 0, %s250
    $region4: #{transformer_forward.1} parent=1 // loop_header_branch
      %24 = sbr.rel (%p22) target = $region8
    $region5: #{transformer_forward.1} parent=1 // loop_body
      %s26 = ssub.s32 %s21, 1
      %s27 = ssub.s32 %s21, 2
      %s28 = sadd.s32 %s21, 1
      %s29 = ssub.s32 %s21, %s28
      %p30 = scmp.eq.s32.totalorder %s29, 0
      %s32 = sadd.s32 %s31, 1
      %s33 = scalar_select %p30, %s31, %s32
      %p36 = pneg %p30
      %p37 = scmp.eq.s32.totalorder %s21, 1
      %p38 = por %p36, %p37
      %p39 = scmp.ne.s32.totalorder %s31, %s34
      %p40 = scmp.eq.s32.totalorder %s21, 0
      %p41 = por %p39, %p40
      %p42 = scmp.ne.s32.totalorder %s31, %s34
      %p43 = scmp.eq.s32.totalorder %s26, 1
      %p44 = por %p42, %p43
      %p45 = scmp.ne.s32.totalorder %s34, %s35
      %p46 = scmp.eq.s32.totalorder %s26, 0
      %p47 = por %p45, %p46
      %p48 = scmp.ne.s32.totalorder %s34, %s35
      %p49 = scmp.eq.s32.totalorder %s27, 1
      %p50 = por %p48, %p49
      %p52 = scmp.ne.s32.totalorder %s35, %s51
      %p53 = scmp.eq.s32.totalorder %s27, 0
      %p54 = por %p52, %p53
      %s56 = sadd.s32 %s55, 1
      %p59 = scmp.eq.s32.totalorder %s21, 1
      %p60 = scmp.ne.s32.totalorder %s55, %s57
      %p61 = scmp.eq.s32.totalorder %s21, 0
      %p62 = por %p60, %p61
      %p63 = scmp.ne.s32.totalorder %s55, %s57
      %p64 = scmp.eq.s32.totalorder %s26, 1
      %p65 = por %p63, %p64
      %p66 = scmp.ne.s32.totalorder %s57, %s58
      %p67 = scmp.eq.s32.totalorder %s26, 0
      %p68 = por %p66, %p67
      %p69 = scmp.ne.s32.totalorder %s57, %s58
      %p70 = scmp.eq.s32.totalorder %s27, 1
      %p71 = por %p69, %p70
      %p73 = scmp.ne.s32.totalorder %s58, %s72
      %p74 = scmp.eq.s32.totalorder %s27, 0
      %p75 = por %p73, %p74
      %s77 = sadd.s32 %s76, 1
      %p80 = scmp.eq.s32.totalorder %s21, 1
      %p81 = scmp.ne.s32.totalorder %s76, %s78
      %p82 = scmp.eq.s32.totalorder %s21, 0
      %p83 = por %p81, %p82
      %p84 = scmp.ne.s32.totalorder %s76, %s78
      %p85 = scmp.eq.s32.totalorder %s26, 1
      %p86 = por %p84, %p85
      %p87 = scmp.ne.s32.totalorder %s78, %s79
      %p88 = scmp.eq.s32.totalorder %s26, 0
      %p89 = por %p87, %p88
      %p90 = scmp.ne.s32.totalorder %s78, %s79
      %p91 = scmp.eq.s32.totalorder %s27, 1
      %p92 = por %p90, %p91
      %p94 = scmp.ne.s32.totalorder %s79, %s93
      %p95 = scmp.eq.s32.totalorder %s27, 0
      %p96 = por %p94, %p95
      %s98 = sadd.s32 %s97, 1
      %p101 = scmp.eq.s32.totalorder %s21, 1
      %p102 = scmp.ne.s32.totalorder %s97, %s99
      %p103 = scmp.eq.s32.totalorder %s21, 0
      %p104 = por %p102, %p103
      %p105 = scmp.ne.s32.totalorder %s97, %s99
      %p106 = scmp.eq.s32.totalorder %s26, 1
      %p107 = por %p105, %p106
      %p108 = scmp.ne.s32.totalorder %s99, %s100
      %p109 = scmp.eq.s32.totalorder %s26, 0
      %p110 = por %p108, %p109
      %p111 = scmp.ne.s32.totalorder %s99, %s100
      %p112 = scmp.eq.s32.totalorder %s27, 1
      %p113 = por %p111, %p112
      %p115 = scmp.ne.s32.totalorder %s100, %s114
      %p116 = scmp.eq.s32.totalorder %s27, 0
      %p117 = por %p115, %p116
      %s119 = sadd.s32 %s118, 1
      %p122 = scmp.eq.s32.totalorder %s21, 1
      %p123 = scmp.ne.s32.totalorder %s118, %s120
      %p124 = scmp.eq.s32.totalorder %s21, 0
      %p125 = por %p123, %p124
      %p126 = scmp.ne.s32.totalorder %s118, %s120
      %p127 = scmp.eq.s32.totalorder %s26, 1
      %p128 = por %p126, %p127
      %p129 = scmp.ne.s32.totalorder %s120, %s121
      %p130 = scmp.eq.s32.totalorder %s26, 0
      %p131 = por %p129, %p130
      %p132 = scmp.ne.s32.totalorder %s120, %s121
      %p133 = scmp.eq.s32.totalorder %s27, 1
      %p134 = por %p132, %p133
      %p136 = scmp.ne.s32.totalorder %s121, %s135
      %p137 = scmp.eq.s32.totalorder %s27, 0
      %p138 = por %p136, %p137
      %s140 = sadd.s32 %s139, 1
      %p143 = scmp.eq.s32.totalorder %s21, 1
      %p144 = scmp.ne.s32.totalorder %s139, %s141
      %p145 = scmp.eq.s32.totalorder %s21, 0
      %p146 = por %p144, %p145
      %p147 = scmp.ne.s32.totalorder %s139, %s141
      %p148 = scmp.eq.s32.totalorder %s26, 1
      %p149 = por %p147, %p148
      %p150 = scmp.ne.s32.totalorder %s141, %s142
      %p151 = scmp.eq.s32.totalorder %s26, 0
      %p152 = por %p150, %p151
      %p153 = scmp.ne.s32.totalorder %s141, %s142
      %p154 = scmp.eq.s32.totalorder %s27, 1
      %p155 = por %p153, %p154
      %p157 = scmp.ne.s32.totalorder %s142, %s156
      %p158 = scmp.eq.s32.totalorder %s27, 0
      %p159 = por %p157, %p158
      %s161 = sadd.s32 %s160, 1
      %p164 = scmp.eq.s32.totalorder %s21, 1
      %p165 = scmp.ne.s32.totalorder %s160, %s162
      %p166 = scmp.eq.s32.totalorder %s21, 0
      %p167 = por %p165, %p166
      %p168 = scmp.ne.s32.totalorder %s160, %s162
      %p169 = scmp.eq.s32.totalorder %s26, 1
      %p170 = por %p168, %p169
      %p171 = scmp.ne.s32.totalorder %s162, %s163
      %p172 = scmp.eq.s32.totalorder %s26, 0
      %p173 = por %p171, %p172
      %p174 = scmp.ne.s32.totalorder %s162, %s163
      %p175 = scmp.eq.s32.totalorder %s27, 1
      %p176 = por %p174, %p175
      %p178 = scmp.ne.s32.totalorder %s163, %s177
      %p179 = scmp.eq.s32.totalorder %s27, 0
      %p180 = por %p178, %p179
      %s182 = sadd.s32 %s181, 1
      %p185 = scmp.eq.s32.totalorder %s21, 1
      %p186 = scmp.ne.s32.totalorder %s181, %s183
      %p187 = scmp.eq.s32.totalorder %s21, 0
      %p188 = por %p186, %p187
      %p189 = scmp.ne.s32.totalorder %s181, %s183
      %p190 = scmp.eq.s32.totalorder %s26, 1
      %p191 = por %p189, %p190
      %p192 = scmp.ne.s32.totalorder %s183, %s184
      %p193 = scmp.eq.s32.totalorder %s26, 0
      %p194 = por %p192, %p193
      %p195 = scmp.ne.s32.totalorder %s183, %s184
      %p196 = scmp.eq.s32.totalorder %s27, 1
      %p197 = por %p195, %p196
      %p199 = scmp.ne.s32.totalorder %s184, %s198
      %p200 = scmp.eq.s32.totalorder %s27, 0
      %p201 = por %p199, %p200
      %s203 = sadd.s32 %s202, 1
      %p206 = scmp.eq.s32.totalorder %s21, 1
      %p207 = scmp.ne.s32.totalorder %s202, %s204
      %p208 = scmp.eq.s32.totalorder %s21, 0
      %p209 = por %p207, %p208
      %p210 = scmp.ne.s32.totalorder %s202, %s204
      %p211 = scmp.eq.s32.totalorder %s26, 1
      %p212 = por %p210, %p211
      %p213 = scmp.ne.s32.totalorder %s204, %s205
      %p214 = scmp.eq.s32.totalorder %s26, 0
      %p215 = por %p213, %p214
      %p216 = scmp.ne.s32.totalorder %s204, %s205
      %p217 = scmp.eq.s32.totalorder %s27, 1
      %p218 = por %p216, %p217
      %p220 = scmp.ne.s32.totalorder %s205, %s219
      %p221 = scmp.eq.s32.totalorder %s27, 0
      %p222 = por %p220, %p221
      %s224 = sadd.s32 %s223, 1
      %p227 = scmp.eq.s32.totalorder %s21, 1
      %p228 = scmp.ne.s32.totalorder %s223, %s225
      %p229 = scmp.eq.s32.totalorder %s21, 0
      %p230 = por %p228, %p229
      %p231 = scmp.ne.s32.totalorder %s223, %s225
      %p232 = scmp.eq.s32.totalorder %s26, 1
      %p233 = por %p231, %p232
      %p234 = scmp.ne.s32.totalorder %s225, %s226
      %p235 = scmp.eq.s32.totalorder %s26, 0
      %p236 = por %p234, %p235
      %p237 = scmp.ne.s32.totalorder %s225, %s226
      %p238 = scmp.eq.s32.totalorder %s27, 1
      %p239 = por %p237, %p238
      %p241 = scmp.ne.s32.totalorder %s226, %s240
      %p242 = scmp.eq.s32.totalorder %s27, 0
      %p243 = por %p241, %p242
      %s244 = ssub.s32 %s21, %s28
      %p245 = scmp.eq.s32.totalorder %s244, 0
      %s247 = sadd.s32 %s246, 1
      %s248 = scalar_select %p245, %s246, %s247
      %p251 = pneg %p245
      %p252 = scmp.eq.s32.totalorder %s21, 1
      %p253 = por %p251, %p252
      %p254 = scmp.ne.s32.totalorder %s246, %s249
      %p255 = scmp.eq.s32.totalorder %s21, 0
      %p256 = por %p254, %p255
      %p257 = scmp.ne.s32.totalorder %s246, %s249
      %p258 = scmp.eq.s32.totalorder %s26, 1
      %p259 = por %p257, %p258
      %p260 = scmp.ne.s32.totalorder %s249, %s250
      %p261 = scmp.eq.s32.totalorder %s26, 0
      %p262 = por %p260, %p261
      %p263 = scmp.ne.s32.totalorder %s249, %s250
      %p264 = scmp.eq.s32.totalorder %s27, 1
      %p265 = por %p263, %p264
      %p267 = scmp.ne.s32.totalorder %s250, %s266
      %p268 = scmp.eq.s32.totalorder %s27, 0
      %p269 = por %p267, %p268
      %p270 = scmp.le.s32.totalorder 1, %s21
      %p271 = scmp.lt.s32.totalorder %s21, 3
      %p272 = pnand %p270, %p271
      %p273 = pneg %p272
      // Predicated region
      $region9: #{transformer_forward.1} parent=5 // pred_check
        _
      $region10: #{transformer_forward.1} parent=5 // pred_check_branch
        %275 = sbr.rel (%p272) target = $region12
      $region11: #{transformer_forward.1} parent=5 // pred_region
        %s276 = ssub.s32 %s21, 1
        // Predicated region
        $region13: #{transformer_forward.1} parent=11 // pred_check
          %p277 = pneg %p68
        $region14: #{transformer_forward.1} parent=11 // pred_check_branch
          %279 = sbr.rel (%p277) target = $region16
        $region15: #{transformer_forward.1} parent=11 // pred_region
          _
        $region16: #{transformer_forward.1} parent=11 // pred_fallthru
          _
        // Predicated region
        $region17: #{transformer_forward.1} parent=11 // pred_check
          %p280 = pneg %p89
        $region18: #{transformer_forward.1} parent=11 // pred_check_branch
          %282 = sbr.rel (%p280) target = $region20
        $region19: #{transformer_forward.1} parent=11 // pred_region
          _
        $region20: #{transformer_forward.1} parent=11 // pred_fallthru
          _
        // Predicated region
        $region21: #{transformer_forward.1} parent=11 // pred_check
          %p283 = pneg %p110
        $region22: #{transformer_forward.1} parent=11 // pred_check_branch
          %285 = sbr.rel (%p283) target = $region24
        $region23: #{transformer_forward.1} parent=11 // pred_region
          _
        $region24: #{transformer_forward.1} parent=11 // pred_fallthru
          _
        // Predicated region
        $region25: #{transformer_forward.1} parent=11 // pred_check
          %p286 = pneg %p131
        $region26: #{transformer_forward.1} parent=11 // pred_check_branch
          %288 = sbr.rel (%p286) target = $region28
        $region27: #{transformer_forward.1} parent=11 // pred_region
          %290 = vsyncadd [#allocation3], 0
          %s291 = sshll.u32 %s4, 4
          %s292 = int_to_ptr.hbm [resolvable:$true] %s291
          %s293 = sshll.u32 [#allocation2], 4
          %s294 = int_to_ptr.vmem [resolvable:$true] %s293
          %299 = dma.hbm_to_vmem [thread:$0]  %s292, 1024, %s294, [#allocation3], 128, 128, 8
        $region28: #{transformer_forward.1} parent=11 // pred_fallthru
          _
        // Predicated region
        $region29: #{transformer_forward.1} parent=11 // pred_check
          %p300 = pneg %p152
        $region30: #{transformer_forward.1} parent=11 // pred_check_branch
          %302 = sbr.rel (%p300) target = $region32
        $region31: #{transformer_forward.1} parent=11 // pred_region
          %304 = vsyncadd [#allocation6], 0
          %s305 = sshll.u32 %s5, 4
          %s306 = int_to_ptr.hbm [resolvable:$true] %s305
          %s307 = sshll.u32 [#allocation5], 4
          %s308 = int_to_ptr.vmem [resolvable:$true] %s307
          %313 = dma.hbm_to_vmem [thread:$0]  %s306, 1024, %s308, [#allocation6], 128, 128, 8
        $region32: #{transformer_forward.1} parent=11 // pred_fallthru
          _
        // Predicated region
        $region33: #{transformer_forward.1} parent=11 // pred_check
          %p314 = pneg %p173
        $region34: #{transformer_forward.1} parent=11 // pred_check_branch
          %316 = sbr.rel (%p314) target = $region36
        $region35: #{transformer_forward.1} parent=11 // pred_region
          _
        $region36: #{transformer_forward.1} parent=11 // pred_fallthru
          _
        // Predicated region
        $region37: #{transformer_forward.1} parent=11 // pred_check
          %p317 = pneg %p194
        $region38: #{transformer_forward.1} parent=11 // pred_check_branch
          %319 = sbr.rel (%p317) target = $region40
        $region39: #{transformer_forward.1} parent=11 // pred_region
          _
        $region40: #{transformer_forward.1} parent=11 // pred_fallthru
          _
        // Predicated region
        $region41: #{transformer_forward.1} parent=11 // pred_check
          %p320 = pneg %p215
        $region42: #{transformer_forward.1} parent=11 // pred_check_branch
          %322 = sbr.rel (%p320) target = $region44
        $region43: #{transformer_forward.1} parent=11 // pred_region
          _
        $region44: #{transformer_forward.1} parent=11 // pred_fallthru
          _
        // Predicated region
        $region45: #{transformer_forward.1} parent=11 // pred_check
          %p323 = pneg %p236
        $region46: #{transformer_forward.1} parent=11 // pred_check_branch
          %325 = sbr.rel (%p323) target = $region48
        $region47: #{transformer_forward.1} parent=11 // pred_region
          _
        $region48: #{transformer_forward.1} parent=11 // pred_fallthru
          _
      $region12: #{transformer_forward.1} parent=5 // pred_fallthru
        _
      %p326 = scmp.lt.s32.totalorder %s21, 2
      // Predicated region
      $region49: #{transformer_forward.1} parent=5 // pred_check
        %p327 = pneg %p326
      $region50: #{transformer_forward.1} parent=5 // pred_check_branch
        %329 = sbr.rel (%p327) target = $region52
      $region51: #{transformer_forward.1} parent=5 // pred_region
        // Predicated region
        $region53: #{transformer_forward.1} parent=51 // pred_check
          %p330 = pneg %p41
        $region54: #{transformer_forward.1} parent=51 // pred_check_branch
          %332 = sbr.rel (%p330) target = $region56
        $region55: #{transformer_forward.1} parent=51 // pred_region
          %p333 = scmp.lt.s32.totalorder %s21, 1
          %s334 = scalar_select %p333, %s21, 1
          %s335 = smul.addr %s334, 8
          %s336 = scalar_lea.vmem %s0, %s335
        $region56: #{transformer_forward.1} parent=51 // pred_fallthru
          _
      $region52: #{transformer_forward.1} parent=5 // pred_fallthru
        _
      %p337 = scmp.le.s32.totalorder 1, %s21
      %p338 = scmp.lt.s32.totalorder %s21, 3
      %p339 = pnand %p337, %p338
      %p340 = pneg %p339
      // Predicated region
      $region57: #{transformer_forward.1} parent=5 // pred_check
        _
      $region58: #{transformer_forward.1} parent=5 // pred_check_branch
        %342 = sbr.rel (%p339) target = $region60
      $region59: #{transformer_forward.1} parent=5 // pred_region
        %s343 = ssub.s32 %s21, 1
        // Predicated region
        $region61: #{transformer_forward.1} parent=59 // pred_check
          %p344 = pneg %p131
        $region62: #{transformer_forward.1} parent=59 // pred_check_branch
          %346 = sbr.rel (%p344) target = $region64
        $region63: #{transformer_forward.1} parent=59 // pred_region
          %348 = dma.done [#allocation3], 1024
        $region64: #{transformer_forward.1} parent=59 // pred_fallthru
          _
        // Predicated region
        $region65: #{transformer_forward.1} parent=59 // pred_check
          %p349 = pneg %p152
        $region66: #{transformer_forward.1} parent=59 // pred_check_branch
          %351 = sbr.rel (%p349) target = $region68
        $region67: #{transformer_forward.1} parent=59 // pred_region
          %353 = dma.done [#allocation6], 1024
        $region68: #{transformer_forward.1} parent=59 // pred_fallthru
          _
        %p354 = scmp.lt.s32.totalorder %s26, 1
        %s355 = scalar_select %p354, %s26, 1
        %s356 = smul.addr %s355, 8
        %s357 = scalar_lea.vmem %s0, %s356
        %p358 = pneg %p47
        %p359 = pneg %p44
        %p360 = pneg %p68
        %p361 = pneg %p65
        %p362 = pneg %p89
        %p363 = pneg %p86
        %p364 = pneg %p110
        %p365 = pneg %p107
        %p366 = pneg %p131
        %p367 = pneg %p128
        %p368 = pneg %p152
        %p369 = pneg %p149
        %p370 = pneg %p173
        %p371 = pneg %p170
        %p372 = pneg %p194
        %p373 = pneg %p191
        %p374 = pneg %p215
        %p375 = pneg %p212
        %p376 = pneg %p236
        %p377 = pneg %p233
        %p378 = pneg %p262
        %p379 = pneg %p259
        %s380 = sand.u32 %s249, 1
        %s381 = scalar_lea.sflag [#allocation4], %s380
        %s382 = sand.u32 %s249, 1
        %s383 = smul.addr %s382, 8
        %s384 = scalar_lea.vmem [#allocation7], %s383
        %p385 = scmp.lt.s32.totalorder %s26, 1
        %s386 = scalar_select %p385, %s26, 1
        %s387 = smul.addr %s386, 8
        %s388 = scalar_lea.vmem %s0, %s387
        %v389 = vld [vmem:[%s388] sm:$0xff]
        %v390 = vld [vmem:[%s1] sm:$0xff]
        %v391 = vld [vmem:[%s1 + $0x8] sm:$0xff]
        %v392 = vld [vmem:[%s1 + $0x10] sm:$0xff]
        %v393 = vld [vmem:[%s1 + $0x18] sm:$0xff]
        %v394 = vld [vmem:[%s2] sm:$0xff]
        %v395 = vld [vmem:[%s2 + $0x8] sm:$0xff]
        %v396 = vld [vmem:[%s2 + $0x10] sm:$0xff]
        %v397 = vld [vmem:[%s2 + $0x18] sm:$0xff]
        %v398 = vld [vmem:[%s3] sm:$0xff]
        %v399 = vld [vmem:[%s3 + $0x8] sm:$0xff]
        %v400 = vld [vmem:[%s3 + $0x10] sm:$0xff]
        %v401 = vld [vmem:[%s3 + $0x18] sm:$0xff]
        %v402 = vld [vmem:[#allocation2] sm:$0xff]
        %v403 = vld [vmem:[#allocation2 + $0x8] sm:$0xff]
        %v404 = vld [vmem:[#allocation2 + $0x10] sm:$0xff]
        %v405 = vld [vmem:[#allocation2 + $0x18] sm:$0xff]
        %v406 = vld [vmem:[#allocation5] sm:$0xff]
        %v407 = vld [vmem:[#allocation5 + $0x8] sm:$0xff]
        %v408 = vld [vmem:[#allocation5 + $0x10] sm:$0xff]
        %v409 = vld [vmem:[#allocation5 + $0x18] sm:$0xff]
        %v410 = vld [vmem:[%s6] sm:$0xff]
        %v411 = vld [vmem:[%s6 + $0x8] sm:$0xff]
        %v412 = vld [vmem:[%s6 + $0x10] sm:$0xff]
        %v413 = vld [vmem:[%s6 + $0x18] sm:$0xff]
        %v414 = vld [vmem:[%s6 + $0x20] sm:$0xff]
        %v415 = vld [vmem:[%s6 + $0x28] sm:$0xff]
        %v416 = vld [vmem:[%s6 + $0x30] sm:$0xff]
        %v417 = vld [vmem:[%s6 + $0x38] sm:$0xff]
        %v418 = vld [vmem:[%s7] sm:$0x3f]
        %v419 = vld [vmem:[%s8] sm:$0x1]
        %vm420 = vcmask 261120
        %v421 = vsel %vm420, %v389, 0.0
        %422 = vadd.xlane.f32.xlu0 %v421
        %v423 = vpop.xlane.xlu0 %422
        %v424 = vrcp.pop 32.0
        %v425 = vmul.f32 32.0, %v424
        %v426 = vsub.f32 1.0, %v425
        %v427 = vmul.f32 %v424, %v426
        %v428 = vadd.f32 %v424, %v427
        %vm429 = vweird.f32 %v424
        %v430 = vsel %vm429, %v424, %v428
        %v431 = vmul.f32 %v423, %v430
        %v432 = vsub.f32 %v389, %v431
        %v433 = vmul.f32 %v432, %v432
        %v434 = vsel %vm420, %v433, 0.0
        %435 = vadd.xlane.f32.xlu0 %v434
        %v436 = vpop.xlane.xlu0 %435
        %v437 = vmul.f32 %v436, %v430
        %v438 = vadd.f32 %v437, 1e-05
        %v439 = vrsqrt.pop %v438
        %v440 = vmul.f32 %v439, %v438
        %v441 = vmul.f32 %v440, %v439
        %v442 = vmul.f32 0.5, %v441
        %v443 = vsub.f32 1.5, %v442
        %v444 = vmul.f32 %v439, %v443
        %vm445 = vweird.f32 %v438
        %vm446 = vweird.f32 %v439
        %vm447 = vmor %vm445, %vm446
        %v448 = vsel %vm447, %v439, %v444
        %v449 = vmul.f32 %v432, %v448
        %v450 = vperm.slane %v418, 0
        %v451 = vmul.f32 %v449, %v450
        %v452 = vperm.slane %v418, 1
        %v453 = vadd.f32 %v451, %v452
        %v455 = vsel %vm420, %v453, 0
        %457 = vmatpush.msra.mxu0 0.0
        %458 = vmatpush.msra.mxu0 0.0
        %459 = vmatpush.msra.mxu0 0.0
        %460 = vmatpush.msra.mxu0 0.0
        %461 = vmatpush.msra.mxu0 0.0
        %462 = vmatpush.msra.mxu0 0.0
        %463 = vmatpush.msra.mxu0 0.0
        %464 = vmatpush.msra.mxu0 0.0
        %465 = vmatpush.msra.mxu0 0.0
        %466 = vmatpush.msra.mxu0 0.0
        %467 = vmatpush.msra.mxu0 0.0
        %468 = vmatpush.msra.mxu0 0.0
        %469 = vmatpush.msra.mxu0 %v393
        %470 = vmatpush.msra.mxu0 %v392
        %471 = vmatpush.msra.mxu0 %v391
        %472 = vmatpush.msra.mxu0 %v390
        %473 = vmatmul.f32.gmra.mxu0 %v455
        %v474 = vpop.f32.mrf.mxu0
        %v475 = vadd.f32 0.0, %v474
        %476 = vdwg.mxu0
        %v477 = vmul.f32 %v475, 0.35355338
        %478 = vmatpush.msra.mxu0 0.0
        %479 = vmatpush.msra.mxu0 0.0
        %480 = vmatpush.msra.mxu0 0.0
        %481 = vmatpush.msra.mxu0 0.0
        %482 = vmatpush.msra.mxu0 0.0
        %483 = vmatpush.msra.mxu0 0.0
        %484 = vmatpush.msra.mxu0 0.0
        %485 = vmatpush.msra.mxu0 0.0
        %486 = vmatpush.msra.mxu0 0.0
        %487 = vmatpush.msra.mxu0 0.0
        %488 = vmatpush.msra.mxu0 0.0
        %489 = vmatpush.msra.mxu0 0.0
        %490 = vmatpush.msra.mxu0 %v397
        %491 = vmatpush.msra.mxu0 %v396
        %492 = vmatpush.msra.mxu0 %v395
        %493 = vmatpush.msra.mxu0 %v394
        %494 = vmatmul.f32.gmra.mxu0 %v455
        %v495 = vpop.f32.mrf.mxu0
        %v496 = vadd.f32 0.0, %v495
        %497 = vdwg.mxu0
        %498 = vmatpush.msra.mxu0 0.0
        %499 = vmatpush.msra.mxu0 0.0
        %500 = vmatpush.msra.mxu0 0.0
        %501 = vmatpush.msra.mxu0 0.0
        %502 = vmatpush.msra.mxu0 0.0
        %503 = vmatpush.msra.mxu0 0.0
        %504 = vmatpush.msra.mxu0 0.0
        %505 = vmatpush.msra.mxu0 0.0
        %506 = vmatpush.msra.mxu0 0.0
        %507 = vmatpush.msra.mxu0 0.0
        %508 = vmatpush.msra.mxu0 0.0
        %509 = vmatpush.msra.mxu0 0.0
        %510 = vmatpush.msra.mxu0 %v401
        %511 = vmatpush.msra.mxu0 %v400
        %512 = vmatpush.msra.mxu0 %v399
        %513 = vmatpush.msra.mxu0 %v398
        %514 = vmatmul.f32.gmra.mxu0 %v455
        %v515 = vpop.f32.mrf.mxu0
        %v516 = vadd.f32 0.0, %v515
        %517 = vdwg.mxu0
        %vm518 = vcmask 64512
        %v520 = vsel %vm518, %v477, 0
        %v523 = vsel %vm518, %v496, 0
        %525 = vmatpush.xpose.msra.mxu0 0.0
        %526 = vmatpush.xpose.msra.mxu0 0.0
        %527 = vmatpush.xpose.msra.mxu0 0.0
        %528 = vmatpush.xpose.msra.mxu0 0.0
        %529 = vmatpush.xpose.msra.mxu0 0.0
        %530 = vmatpush.xpose.msra.mxu0 0.0
        %531 = vmatpush.xpose.msra.mxu0 0.0
        %532 = vmatpush.xpose.msra.mxu0 0.0
        %533 = vmatpush.xpose.msra.mxu0 0.0
        %534 = vmatpush.xpose.msra.mxu0 0.0
        %535 = vmatpush.xpose.msra.mxu0 0.0
        %536 = vmatpush.xpose.msra.mxu0 0.0
        %537 = vmatpush.xpose.msra.mxu0 0.0
        %538 = vmatpush.xpose.msra.mxu0 0.0
        %539 = vmatpush.xpose.msra.mxu0 0.0
        %540 = vmatpush.xpose.msra.mxu0 %v523
        %541 = vmatmul.f32.gmra.mxu0 %v520
        %v542 = vpop.f32.mrf.mxu0
        %v543 = vadd.f32 0.0, %v542
        %544 = vdwg.mxu0
        %v545 = vsel %vm518, %v543, -inf
        %546 = vmax.xlane.f32.xlu0 %v545
        %v547 = vpop.xlane.xlu0 %546
        %v548 = vsub.f32 %v543, %v547
        %v549 = vmul.f32 %v548, 1.442695
        %v550 = vpow.pop %v549
        %v551 = vsel %vm518, %v550, 0.0
        %552 = vadd.xlane.f32.xlu0 %v551
        %v553 = vpop.xlane.xlu0 %552
        %v554 = vrcp.pop %v553
        %v555 = vmul.f32 %v553, %v554
        %v556 = vsub.f32 2.0, %v555
        %v557 = vmul.f32 %v554, %v556
        %v558 = vmul.f32 %v550, %v557
        %v560 = vsel %vm518, %v558, 0
        %562 = vmatpush.msra.mxu0 0.0
        %563 = vmatpush.msra.mxu0 0.0
        %564 = vmatpush.msra.mxu0 0.0
        %565 = vmatpush.msra.mxu0 0.0
        %566 = vmatpush.msra.mxu0 0.0
        %567 = vmatpush.msra.mxu0 0.0
        %568 = vmatpush.msra.mxu0 0.0
        %569 = vmatpush.msra.mxu0 0.0
        %570 = vmatpush.msra.mxu0 0.0
        %571 = vmatpush.msra.mxu0 0.0
        %572 = vmatpush.msra.mxu0 0.0
        %573 = vmatpush.msra.mxu0 0.0
        %574 = vmatpush.msra.mxu0 0.0
        %575 = vmatpush.msra.mxu0 0.0
        %576 = vmatpush.msra.mxu0 0.0
        %577 = vmatpush.msra.mxu0 %v516
        %578 = vmatmul.f32.gmra.mxu0 %v560
        %v579 = vpop.f32.mrf.mxu0
        %v580 = vadd.f32 0.0, %v579
        %581 = vdwg.mxu0
        %582 = vrot.lane.b32.xlu0 %v477, 120
        %v583 = vpop.permute.xlu0 %582
        %584 = vrot.lane.b32.xlu0 %v496, 120
        %v585 = vpop.permute.xlu0 %584
        %v586 = vsel %vm518, %v583, 0
        %v588 = vsel %vm518, %v585, 0
        %590 = vmatpush.xpose.msra.mxu0 0.0
        %591 = vmatpush.xpose.msra.mxu0 0.0
        %592 = vmatpush.xpose.msra.mxu0 0.0
        %593 = vmatpush.xpose.msra.mxu0 0.0
        %594 = vmatpush.xpose.msra.mxu0 0.0
        %595 = vmatpush.xpose.msra.mxu0 0.0
        %596 = vmatpush.xpose.msra.mxu0 0.0
        %597 = vmatpush.xpose.msra.mxu0 0.0
        %598 = vmatpush.xpose.msra.mxu0 0.0
        %599 = vmatpush.xpose.msra.mxu0 0.0
        %600 = vmatpush.xpose.msra.mxu0 0.0
        %601 = vmatpush.xpose.msra.mxu0 0.0
        %602 = vmatpush.xpose.msra.mxu0 0.0
        %603 = vmatpush.xpose.msra.mxu0 0.0
        %604 = vmatpush.xpose.msra.mxu0 0.0
        %605 = vmatpush.xpose.msra.mxu0 %v588
        %606 = vmatmul.f32.gmra.mxu0 %v586
        %v607 = vpop.f32.mrf.mxu0
        %v608 = vadd.f32 0.0, %v607
        %609 = vdwg.mxu0
        %v610 = vsel %vm518, %v608, -inf
        %611 = vmax.xlane.f32.xlu0 %v610
        %v612 = vpop.xlane.xlu0 %611
        %v613 = vsub.f32 %v608, %v612
        %v614 = vmul.f32 %v613, 1.442695
        %v615 = vpow.pop %v614
        %v616 = vsel %vm518, %v615, 0.0
        %617 = vadd.xlane.f32.xlu0 %v616
        %v618 = vpop.xlane.xlu0 %617
        %v619 = vrcp.pop %v618
        %v620 = vmul.f32 %v618, %v619
        %v621 = vsub.f32 2.0, %v620
        %v622 = vmul.f32 %v619, %v621
        %v623 = vmul.f32 %v615, %v622
        %625 = vrot.lane.b32.xlu0 %v516, 120
        %v626 = vpop.permute.xlu0 %625
        %v629 = vsel %vm518, %v623, 0
        %631 = vmatpush.msra.mxu0 0.0
        %632 = vmatpush.msra.mxu0 0.0
        %633 = vmatpush.msra.mxu0 0.0
        %634 = vmatpush.msra.mxu0 0.0
        %635 = vmatpush.msra.mxu0 0.0
        %636 = vmatpush.msra.mxu0 0.0
        %637 = vmatpush.msra.mxu0 0.0
        %638 = vmatpush.msra.mxu0 0.0
        %639 = vmatpush.msra.mxu0 0.0
        %640 = vmatpush.msra.mxu0 0.0
        %641 = vmatpush.msra.mxu0 0.0
        %642 = vmatpush.msra.mxu0 0.0
        %643 = vmatpush.msra.mxu0 0.0
        %644 = vmatpush.msra.mxu0 0.0
        %645 = vmatpush.msra.mxu0 0.0
        %646 = vmatpush.msra.mxu0 %v626
        %647 = vmatmul.f32.gmra.mxu0 %v629
        %v648 = vpop.f32.mrf.mxu0
        %v649 = vadd.f32 0.0, %v648
        %650 = vdwg.mxu0
        %651 = vrot.lane.b32.xlu0 %v477, 112
        %v652 = vpop.permute.xlu0 %651
        %653 = vrot.lane.b32.xlu0 %v496, 112
        %v654 = vpop.permute.xlu0 %653
        %v655 = vsel %vm518, %v652, 0
        %v657 = vsel %vm518, %v654, 0
        %659 = vmatpush.xpose.msra.mxu0 0.0
        %660 = vmatpush.xpose.msra.mxu0 0.0
        %661 = vmatpush.xpose.msra.mxu0 0.0
        %662 = vmatpush.xpose.msra.mxu0 0.0
        %663 = vmatpush.xpose.msra.mxu0 0.0
        %664 = vmatpush.xpose.msra.mxu0 0.0
        %665 = vmatpush.xpose.msra.mxu0 0.0
        %666 = vmatpush.xpose.msra.mxu0 0.0
        %667 = vmatpush.xpose.msra.mxu0 0.0
        %668 = vmatpush.xpose.msra.mxu0 0.0
        %669 = vmatpush.xpose.msra.mxu0 0.0
        %670 = vmatpush.xpose.msra.mxu0 0.0
        %671 = vmatpush.xpose.msra.mxu0 0.0
        %672 = vmatpush.xpose.msra.mxu0 0.0
        %673 = vmatpush.xpose.msra.mxu0 0.0
        %674 = vmatpush.xpose.msra.mxu0 %v657
        %675 = vmatmul.f32.gmra.mxu0 %v655
        %v676 = vpop.f32.mrf.mxu0
        %v677 = vadd.f32 0.0, %v676
        %678 = vdwg.mxu0
        %v679 = vsel %vm518, %v677, -inf
        %680 = vmax.xlane.f32.xlu0 %v679
        %v681 = vpop.xlane.xlu0 %680
        %v682 = vsub.f32 %v677, %v681
        %v683 = vmul.f32 %v682, 1.442695
        %v684 = vpow.pop %v683
        %v685 = vsel %vm518, %v684, 0.0
        %686 = vadd.xlane.f32.xlu0 %v685
        %v687 = vpop.xlane.xlu0 %686
        %v688 = vrcp.pop %v687
        %v689 = vmul.f32 %v687, %v688
        %v690 = vsub.f32 2.0, %v689
        %v691 = vmul.f32 %v688, %v690
        %v692 = vmul.f32 %v684, %v691
        %693 = vrot.lane.b32.xlu0 %v516, 112
        %v694 = vpop.permute.xlu0 %693
        %v697 = vsel %vm518, %v692, 0
        %699 = vmatpush.msra.mxu0 0.0
        %700 = vmatpush.msra.mxu0 0.0
        %701 = vmatpush.msra.mxu0 0.0
        %702 = vmatpush.msra.mxu0 0.0
        %703 = vmatpush.msra.mxu0 0.0
        %704 = vmatpush.msra.mxu0 0.0
        %705 = vmatpush.msra.mxu0 0.0
        %706 = vmatpush.msra.mxu0 0.0
        %707 = vmatpush.msra.mxu0 0.0
        %708 = vmatpush.msra.mxu0 0.0
        %709 = vmatpush.msra.mxu0 0.0
        %710 = vmatpush.msra.mxu0 0.0
        %711 = vmatpush.msra.mxu0 0.0
        %712 = vmatpush.msra.mxu0 0.0
        %713 = vmatpush.msra.mxu0 0.0
        %714 = vmatpush.msra.mxu0 %v694
        %715 = vmatmul.f32.gmra.mxu0 %v697
        %v716 = vpop.f32.mrf.mxu0
        %v717 = vadd.f32 0.0, %v716
        %718 = vdwg.mxu0
        %719 = vrot.lane.b32.xlu0 %v477, 104
        %v720 = vpop.permute.xlu0 %719
        %721 = vrot.lane.b32.xlu0 %v496, 104
        %v722 = vpop.permute.xlu0 %721
        %v723 = vsel %vm518, %v720, 0
        %v725 = vsel %vm518, %v722, 0
        %727 = vmatpush.xpose.msra.mxu0 0.0
        %728 = vmatpush.xpose.msra.mxu0 0.0
        %729 = vmatpush.xpose.msra.mxu0 0.0
        %730 = vmatpush.xpose.msra.mxu0 0.0
        %731 = vmatpush.xpose.msra.mxu0 0.0
        %732 = vmatpush.xpose.msra.mxu0 0.0
        %733 = vmatpush.xpose.msra.mxu0 0.0
        %734 = vmatpush.xpose.msra.mxu0 0.0
        %735 = vmatpush.xpose.msra.mxu0 0.0
        %736 = vmatpush.xpose.msra.mxu0 0.0
        %737 = vmatpush.xpose.msra.mxu0 0.0
        %738 = vmatpush.xpose.msra.mxu0 0.0
        %739 = vmatpush.xpose.msra.mxu0 0.0
        %740 = vmatpush.xpose.msra.mxu0 0.0
        %741 = vmatpush.xpose.msra.mxu0 0.0
        %742 = vmatpush.xpose.msra.mxu0 %v725
        %743 = vmatmul.f32.gmra.mxu0 %v723
        %v744 = vpop.f32.mrf.mxu0
        %v745 = vadd.f32 0.0, %v744
        %746 = vdwg.mxu0
        %v747 = vsel %vm518, %v745, -inf
        %748 = vmax.xlane.f32.xlu0 %v747
        %v749 = vpop.xlane.xlu0 %748
        %v750 = vsub.f32 %v745, %v749
        %v751 = vmul.f32 %v750, 1.442695
        %v752 = vpow.pop %v751
        %v753 = vsel %vm518, %v752, 0.0
        %754 = vadd.xlane.f32.xlu0 %v753
        %v755 = vpop.xlane.xlu0 %754
        %v756 = vrcp.pop %v755
        %v757 = vmul.f32 %v755, %v756
        %v758 = vsub.f32 2.0, %v757
        %v759 = vmul.f32 %v756, %v758
        %v760 = vmul.f32 %v752, %v759
        %761 = vrot.lane.b32.xlu0 %v516, 104
        %v762 = vpop.permute.xlu0 %761
        %v765 = vsel %vm518, %v760, 0
        %767 = vmatpush.msra.mxu0 0.0
        %768 = vmatpush.msra.mxu0 0.0
        %769 = vmatpush.msra.mxu0 0.0
        %770 = vmatpush.msra.mxu0 0.0
        %771 = vmatpush.msra.mxu0 0.0
        %772 = vmatpush.msra.mxu0 0.0
        %773 = vmatpush.msra.mxu0 0.0
        %774 = vmatpush.msra.mxu0 0.0
        %775 = vmatpush.msra.mxu0 0.0
        %776 = vmatpush.msra.mxu0 0.0
        %777 = vmatpush.msra.mxu0 0.0
        %778 = vmatpush.msra.mxu0 0.0
        %779 = vmatpush.msra.mxu0 0.0
        %780 = vmatpush.msra.mxu0 0.0
        %781 = vmatpush.msra.mxu0 0.0
        %782 = vmatpush.msra.mxu0 %v762
        %783 = vmatmul.f32.gmra.mxu0 %v765
        %v784 = vpop.f32.mrf.mxu0
        %v785 = vadd.f32 0.0, %v784
        %786 = vdwg.mxu0
        %788 = vrot.lane.b32.xlu0 %v649, 8
        %v789 = vpop.permute.xlu0 %788
        %792 = vrot.lane.b32.xlu0 %v717, 16
        %v793 = vpop.permute.xlu0 %792
        %796 = vrot.lane.b32.xlu0 %v785, 24
        %v797 = vpop.permute.xlu0 %796
        %v799 = vsel %vm518, %v580, %v789
        %vm800 = vcmask 130048
        %v801 = vsel %vm800, %v799, %v793
        %vm802 = vcmask 195584
        %v803 = vsel %vm802, %v801, %v797
        %v805 = vsel %vm420, %v803, 0
        %807 = vmatpush.msra.mxu0 0.0
        %808 = vmatpush.msra.mxu0 0.0
        %809 = vmatpush.msra.mxu0 0.0
        %810 = vmatpush.msra.mxu0 0.0
        %811 = vmatpush.msra.mxu0 0.0
        %812 = vmatpush.msra.mxu0 0.0
        %813 = vmatpush.msra.mxu0 0.0
        %814 = vmatpush.msra.mxu0 0.0
        %815 = vmatpush.msra.mxu0 0.0
        %816 = vmatpush.msra.mxu0 0.0
        %817 = vmatpush.msra.mxu0 0.0
        %818 = vmatpush.msra.mxu0 0.0
        %819 = vmatpush.msra.mxu0 %v405
        %820 = vmatpush.msra.mxu0 %v404
        %821 = vmatpush.msra.mxu0 %v403
        %822 = vmatpush.msra.mxu0 %v402
        %823 = vmatmul.f32.gmra.mxu0 %v805
        %v824 = vpop.f32.mrf.mxu0
        %v825 = vadd.f32 0.0, %v824
        %826 = vdwg.mxu0
        %v827 = vadd.f32 %v389, %v825
        %v828 = vperm.slane %v418, 2
        %v829 = vadd.f32 %v827, %v828
        %v830 = vsel %vm420, %v829, 0.0
        %831 = vadd.xlane.f32.xlu0 %v830
        %v832 = vpop.xlane.xlu0 %831
        %v833 = vmul.f32 %v832, %v430
        %v834 = vsub.f32 %v829, %v833
        %v835 = vmul.f32 %v834, %v834
        %v836 = vsel %vm420, %v835, 0.0
        %837 = vadd.xlane.f32.xlu0 %v836
        %v838 = vpop.xlane.xlu0 %837
        %v839 = vmul.f32 %v838, %v430
        %v840 = vadd.f32 %v839, 1e-05
        %v841 = vrsqrt.pop %v840
        %v842 = vmul.f32 %v841, %v840
        %v843 = vmul.f32 %v842, %v841
        %v844 = vmul.f32 0.5, %v843
        %v845 = vsub.f32 1.5, %v844
        %v846 = vmul.f32 %v841, %v845
        %vm847 = vweird.f32 %v840
        %vm848 = vweird.f32 %v841
        %vm849 = vmor %vm847, %vm848
        %v850 = vsel %vm849, %v841, %v846
        %v851 = vmul.f32 %v834, %v850
        %v852 = vperm.slane %v418, 3
        %v853 = vmul.f32 %v851, %v852
        %v854 = vperm.slane %v418, 4
        %v855 = vadd.f32 %v853, %v854
        %v856 = vperm.slane %v419, 0
        %v858 = vsel %vm420, %v855, 0
        %860 = vmatpush.msra.mxu0 0.0
        %861 = vmatpush.msra.mxu0 0.0
        %862 = vmatpush.msra.mxu0 0.0
        %863 = vmatpush.msra.mxu0 0.0
        %864 = vmatpush.msra.mxu0 0.0
        %865 = vmatpush.msra.mxu0 0.0
        %866 = vmatpush.msra.mxu0 0.0
        %867 = vmatpush.msra.mxu0 0.0
        %868 = vmatpush.msra.mxu0 0.0
        %869 = vmatpush.msra.mxu0 0.0
        %870 = vmatpush.msra.mxu0 0.0
        %871 = vmatpush.msra.mxu0 0.0
        %872 = vmatpush.msra.mxu0 %v409
        %873 = vmatpush.msra.mxu0 %v408
        %874 = vmatpush.msra.mxu0 %v407
        %875 = vmatpush.msra.mxu0 %v406
        %876 = vmatmul.f32.gmra.mxu0 %v858
        %v877 = vpop.f32.mrf.mxu0
        %v878 = vadd.f32 %v856, %v877
        %879 = vdwg.mxu0
        %v880 = vmul.f32 %v878, 0.5
        %v881 = vmul.f32 %v878, 0.70710677
        %v882 = vmul.f32 %v881, %v881
        %v883 = vmin.f32 16.0, %v882
        %v884 = vmul.f32 %v883, 2.1237322e-06
        %v885 = vadd.f32 %v884, 0.00028619796
        %v886 = vmul.f32 %v883, %v885
        %v887 = vadd.f32 %v886, 0.0036580483
        %v888 = vmul.f32 %v883, %v887
        %v889 = vadd.f32 %v888, 0.05243302
        %v890 = vmul.f32 %v883, %v889
        %v891 = vadd.f32 %v890, 0.18741608
        %v892 = vmul.f32 %v883, %v891
        %v893 = vadd.f32 %v892, 1.1283791
        %v894 = vmul.f32 %v881, %v893
        %v895 = vmul.f32 %v883, 3.8918573e-05
        %v896 = vadd.f32 %v895, 0.001143296
        %v897 = vmul.f32 %v883, %v896
        %v898 = vadd.f32 %v897, 0.014752088
        %v899 = vmul.f32 %v883, %v898
        %v900 = vadd.f32 %v899, 0.112945676
        %v901 = vmul.f32 %v883, %v900
        %v902 = vadd.f32 %v901, 0.4994258
        %v903 = vmul.f32 %v883, %v902
        %v904 = vadd.f32 %v903, 1.0
        %v905 = vrcp.pop %v904
        %v906 = vmul.f32 %v904, %v905
        %v907 = vsub.f32 1.0, %v906
        %v908 = vmul.f32 %v905, %v907
        %v909 = vadd.f32 %v905, %v908
        %vm910 = vweird.f32 %v904
        %vm911 = vweird.f32 %v905
        %vm912 = vmor %vm910, %vm911
        %v913 = vsel %vm912, %v905, %v909
        %v914 = vand.u32 2147483647, %v904
        %vm915 = vcmp.eq.f32.partialorder %v914, 8.507059e+37
        %v916 = vand.u32 %v904, 2147483648
        %v917 = vor.u32 1.1754944e-38, %v916
        %v918 = vsel %vm915, %v917, %v913
        %v919 = vmul.f32 %v894, %v918
        %v920 = vmin.f32 %v919, 1.0
        %v921 = vmax.f32 %v920, -1.0
        %v922 = vadd.f32 %v921, 1.0
        %v923 = vmul.f32 %v880, %v922
        %vm924 = vcmask 523264
        %v926 = vsel %vm924, %v923, 0
        %928 = vmatpush.msra.mxu0 0.0
        %929 = vmatpush.msra.mxu0 0.0
        %930 = vmatpush.msra.mxu0 0.0
        %931 = vmatpush.msra.mxu0 0.0
        %932 = vmatpush.msra.mxu0 0.0
        %933 = vmatpush.msra.mxu0 0.0
        %934 = vmatpush.msra.mxu0 0.0
        %935 = vmatpush.msra.mxu0 0.0
        %936 = vmatpush.msra.mxu0 %v417
        %937 = vmatpush.msra.mxu0 %v416
        %938 = vmatpush.msra.mxu0 %v415
        %939 = vmatpush.msra.mxu0 %v414
        %940 = vmatpush.msra.mxu0 %v413
        %941 = vmatpush.msra.mxu0 %v412
        %942 = vmatpush.msra.mxu0 %v411
        %943 = vmatpush.msra.mxu0 %v410
        %944 = vmatmul.f32.gmra.mxu0 %v926
        %v945 = vpop.f32.mrf.mxu0
        %v946 = vadd.f32 0.0, %v945
        %947 = vdwg.mxu0
        %v948 = vadd.f32 %v829, %v946
        %v949 = vperm.slane %v418, 5
        %v950 = vadd.f32 %v948, %v949
        %s951 = scalar_lea.vmem %s1, 32
        %v952 = vld [vmem:[%s951] sm:$0xff]
        %v953 = vld [vmem:[%s951 + $0x8] sm:$0xff]
        %v954 = vld [vmem:[%s951 + $0x10] sm:$0xff]
        %v955 = vld [vmem:[%s951 + $0x18] sm:$0xff]
        %s956 = scalar_lea.vmem %s2, 32
        %v957 = vld [vmem:[%s956] sm:$0xff]
        %v958 = vld [vmem:[%s956 + $0x8] sm:$0xff]
        %v959 = vld [vmem:[%s956 + $0x10] sm:$0xff]
        %v960 = vld [vmem:[%s956 + $0x18] sm:$0xff]
        %s961 = scalar_lea.vmem %s3, 32
        %v962 = vld [vmem:[%s961] sm:$0xff]
        %v963 = vld [vmem:[%s961 + $0x8] sm:$0xff]
        %v964 = vld [vmem:[%s961 + $0x10] sm:$0xff]
        %v965 = vld [vmem:[%s961 + $0x18] sm:$0xff]
        %s966 = scalar_lea.vmem [#allocation2], 32
        %v967 = vld [vmem:[%s966] sm:$0xff]
        %v968 = vld [vmem:[%s966 + $0x8] sm:$0xff]
        %v969 = vld [vmem:[%s966 + $0x10] sm:$0xff]
        %v970 = vld [vmem:[%s966 + $0x18] sm:$0xff]
        %s971 = scalar_lea.vmem [#allocation5], 32
        %v972 = vld [vmem:[%s971] sm:$0xff]
        %v973 = vld [vmem:[%s971 + $0x8] sm:$0xff]
        %v974 = vld [vmem:[%s971 + $0x10] sm:$0xff]
        %v975 = vld [vmem:[%s971 + $0x18] sm:$0xff]
        %s976 = scalar_lea.vmem %s6, 64
        %v977 = vld [vmem:[%s976] sm:$0xff]
        %v978 = vld [vmem:[%s976 + $0x8] sm:$0xff]
        %v979 = vld [vmem:[%s976 + $0x10] sm:$0xff]
        %v980 = vld [vmem:[%s976 + $0x18] sm:$0xff]
        %v981 = vld [vmem:[%s976 + $0x20] sm:$0xff]
        %v982 = vld [vmem:[%s976 + $0x28] sm:$0xff]
        %v983 = vld [vmem:[%s976 + $0x30] sm:$0xff]
        %v984 = vld [vmem:[%s976 + $0x38] sm:$0xff]
        %s985 = scalar_lea.vmem %s7, 8
        %v986 = vld [vmem:[%s985] sm:$0x3f]
        %v987 = vld [vmem:[%s8 + $0x1] sm:$0x1]
        %v988 = vsel %vm420, %v950, 0.0
        %989 = vadd.xlane.f32.xlu0 %v988
        %v990 = vpop.xlane.xlu0 %989
        %v991 = vmul.f32 %v990, %v430
        %v992 = vsub.f32 %v950, %v991
        %v993 = vmul.f32 %v992, %v992
        %v994 = vsel %vm420, %v993, 0.0
        %995 = vadd.xlane.f32.xlu0 %v994
        %v996 = vpop.xlane.xlu0 %995
        %v997 = vmul.f32 %v996, %v430
        %v998 = vadd.f32 %v997, 1e-05
        %v999 = vrsqrt.pop %v998
        %v1000 = vmul.f32 %v999, %v998
        %v1001 = vmul.f32 %v1000, %v999
        %v1002 = vmul.f32 0.5, %v1001
        %v1003 = vsub.f32 1.5, %v1002
        %v1004 = vmul.f32 %v999, %v1003
        %vm1005 = vweird.f32 %v998
        %vm1006 = vweird.f32 %v999
        %vm1007 = vmor %vm1005, %vm1006
        %v1008 = vsel %vm1007, %v999, %v1004
        %v1009 = vmul.f32 %v992, %v1008
        %v1010 = vperm.slane %v986, 0
        %v1011 = vmul.f32 %v1009, %v1010
        %v1012 = vperm.slane %v986, 1
        %v1013 = vadd.f32 %v1011, %v1012
        %v1015 = vsel %vm420, %v1013, 0
        %1017 = vmatpush.msra.mxu0 0.0
        %1018 = vmatpush.msra.mxu0 0.0
        %1019 = vmatpush.msra.mxu0 0.0
        %1020 = vmatpush.msra.mxu0 0.0
        %1021 = vmatpush.msra.mxu0 0.0
        %1022 = vmatpush.msra.mxu0 0.0
        %1023 = vmatpush.msra.mxu0 0.0
        %1024 = vmatpush.msra.mxu0 0.0
        %1025 = vmatpush.msra.mxu0 0.0
        %1026 = vmatpush.msra.mxu0 0.0
        %1027 = vmatpush.msra.mxu0 0.0
        %1028 = vmatpush.msra.mxu0 0.0
        %1029 = vmatpush.msra.mxu0 %v955
        %1030 = vmatpush.msra.mxu0 %v954
        %1031 = vmatpush.msra.mxu0 %v953
        %1032 = vmatpush.msra.mxu0 %v952
        %1033 = vmatmul.f32.gmra.mxu0 %v1015
        %v1034 = vpop.f32.mrf.mxu0
        %v1035 = vadd.f32 0.0, %v1034
        %1036 = vdwg.mxu0
        %v1037 = vmul.f32 %v1035, 0.35355338
        %1038 = vmatpush.msra.mxu0 0.0
        %1039 = vmatpush.msra.mxu0 0.0
        %1040 = vmatpush.msra.mxu0 0.0
        %1041 = vmatpush.msra.mxu0 0.0
        %1042 = vmatpush.msra.mxu0 0.0
        %1043 = vmatpush.msra.mxu0 0.0
        %1044 = vmatpush.msra.mxu0 0.0
        %1045 = vmatpush.msra.mxu0 0.0
        %1046 = vmatpush.msra.mxu0 0.0
        %1047 = vmatpush.msra.mxu0 0.0
        %1048 = vmatpush.msra.mxu0 0.0
        %1049 = vmatpush.msra.mxu0 0.0
        %1050 = vmatpush.msra.mxu0 %v960
        %1051 = vmatpush.msra.mxu0 %v959
        %1052 = vmatpush.msra.mxu0 %v958
        %1053 = vmatpush.msra.mxu0 %v957
        %1054 = vmatmul.f32.gmra.mxu0 %v1015
        %v1055 = vpop.f32.mrf.mxu0
        %v1056 = vadd.f32 0.0, %v1055
        %1057 = vdwg.mxu0
        %1058 = vmatpush.msra.mxu0 0.0
        %1059 = vmatpush.msra.mxu0 0.0
        %1060 = vmatpush.msra.mxu0 0.0
        %1061 = vmatpush.msra.mxu0 0.0
        %1062 = vmatpush.msra.mxu0 0.0
        %1063 = vmatpush.msra.mxu0 0.0
        %1064 = vmatpush.msra.mxu0 0.0
        %1065 = vmatpush.msra.mxu0 0.0
        %1066 = vmatpush.msra.mxu0 0.0
        %1067 = vmatpush.msra.mxu0 0.0
        %1068 = vmatpush.msra.mxu0 0.0
        %1069 = vmatpush.msra.mxu0 0.0
        %1070 = vmatpush.msra.mxu0 %v965
        %1071 = vmatpush.msra.mxu0 %v964
        %1072 = vmatpush.msra.mxu0 %v963
        %1073 = vmatpush.msra.mxu0 %v962
        %1074 = vmatmul.f32.gmra.mxu0 %v1015
        %v1075 = vpop.f32.mrf.mxu0
        %v1076 = vadd.f32 0.0, %v1075
        %1077 = vdwg.mxu0
        %v1079 = vsel %vm518, %v1037, 0
        %v1082 = vsel %vm518, %v1056, 0
        %1084 = vmatpush.xpose.msra.mxu0 0.0
        %1085 = vmatpush.xpose.msra.mxu0 0.0
        %1086 = vmatpush.xpose.msra.mxu0 0.0
        %1087 = vmatpush.xpose.msra.mxu0 0.0
        %1088 = vmatpush.xpose.msra.mxu0 0.0
        %1089 = vmatpush.xpose.msra.mxu0 0.0
        %1090 = vmatpush.xpose.msra.mxu0 0.0
        %1091 = vmatpush.xpose.msra.mxu0 0.0
        %1092 = vmatpush.xpose.msra.mxu0 0.0
        %1093 = vmatpush.xpose.msra.mxu0 0.0
        %1094 = vmatpush.xpose.msra.mxu0 0.0
        %1095 = vmatpush.xpose.msra.mxu0 0.0
        %1096 = vmatpush.xpose.msra.mxu0 0.0
        %1097 = vmatpush.xpose.msra.mxu0 0.0
        %1098 = vmatpush.xpose.msra.mxu0 0.0
        %1099 = vmatpush.xpose.msra.mxu0 %v1082
        %1100 = vmatmul.f32.gmra.mxu0 %v1079
        %v1101 = vpop.f32.mrf.mxu0
        %v1102 = vadd.f32 0.0, %v1101
        %1103 = vdwg.mxu0
        %v1104 = vsel %vm518, %v1102, -inf
        %1105 = vmax.xlane.f32.xlu0 %v1104
        %v1106 = vpop.xlane.xlu0 %1105
        %v1107 = vsub.f32 %v1102, %v1106
        %v1108 = vmul.f32 %v1107, 1.442695
        %v1109 = vpow.pop %v1108
        %v1110 = vsel %vm518, %v1109, 0.0
        %1111 = vadd.xlane.f32.xlu0 %v1110
        %v1112 = vpop.xlane.xlu0 %1111
        %v1113 = vrcp.pop %v1112
        %v1114 = vmul.f32 %v1112, %v1113
        %v1115 = vsub.f32 2.0, %v1114
        %v1116 = vmul.f32 %v1113, %v1115
        %v1117 = vmul.f32 %v1109, %v1116
        %v1119 = vsel %vm518, %v1117, 0
        %1121 = vmatpush.msra.mxu0 0.0
        %1122 = vmatpush.msra.mxu0 0.0
        %1123 = vmatpush.msra.mxu0 0.0
        %1124 = vmatpush.msra.mxu0 0.0
        %1125 = vmatpush.msra.mxu0 0.0
        %1126 = vmatpush.msra.mxu0 0.0
        %1127 = vmatpush.msra.mxu0 0.0
        %1128 = vmatpush.msra.mxu0 0.0
        %1129 = vmatpush.msra.mxu0 0.0
        %1130 = vmatpush.msra.mxu0 0.0
        %1131 = vmatpush.msra.mxu0 0.0
        %1132 = vmatpush.msra.mxu0 0.0
        %1133 = vmatpush.msra.mxu0 0.0
        %1134 = vmatpush.msra.mxu0 0.0
        %1135 = vmatpush.msra.mxu0 0.0
        %1136 = vmatpush.msra.mxu0 %v1076
        %1137 = vmatmul.f32.gmra.mxu0 %v1119
        %v1138 = vpop.f32.mrf.mxu0
        %v1139 = vadd.f32 0.0, %v1138
        %1140 = vdwg.mxu0
        %1141 = vrot.lane.b32.xlu0 %v1037, 120
        %v1142 = vpop.permute.xlu0 %1141
        %1143 = vrot.lane.b32.xlu0 %v1056, 120
        %v1144 = vpop.permute.xlu0 %1143
        %v1145 = vsel %vm518, %v1142, 0
        %v1147 = vsel %vm518, %v1144, 0
        %1149 = vmatpush.xpose.msra.mxu0 0.0
        %1150 = vmatpush.xpose.msra.mxu0 0.0
        %1151 = vmatpush.xpose.msra.mxu0 0.0
        %1152 = vmatpush.xpose.msra.mxu0 0.0
        %1153 = vmatpush.xpose.msra.mxu0 0.0
        %1154 = vmatpush.xpose.msra.mxu0 0.0
        %1155 = vmatpush.xpose.msra.mxu0 0.0
        %1156 = vmatpush.xpose.msra.mxu0 0.0
        %1157 = vmatpush.xpose.msra.mxu0 0.0
        %1158 = vmatpush.xpose.msra.mxu0 0.0
        %1159 = vmatpush.xpose.msra.mxu0 0.0
        %1160 = vmatpush.xpose.msra.mxu0 0.0
        %1161 = vmatpush.xpose.msra.mxu0 0.0
        %1162 = vmatpush.xpose.msra.mxu0 0.0
        %1163 = vmatpush.xpose.msra.mxu0 0.0
        %1164 = vmatpush.xpose.msra.mxu0 %v1147
        %1165 = vmatmul.f32.gmra.mxu0 %v1145
        %v1166 = vpop.f32.mrf.mxu0
        %v1167 = vadd.f32 0.0, %v1166
        %1168 = vdwg.mxu0
        %v1169 = vsel %vm518, %v1167, -inf
        %1170 = vmax.xlane.f32.xlu0 %v1169
        %v1171 = vpop.xlane.xlu0 %1170
        %v1172 = vsub.f32 %v1167, %v1171
        %v1173 = vmul.f32 %v1172, 1.442695
        %v1174 = vpow.pop %v1173
        %v1175 = vsel %vm518, %v1174, 0.0
        %1176 = vadd.xlane.f32.xlu0 %v1175
        %v1177 = vpop.xlane.xlu0 %1176
        %v1178 = vrcp.pop %v1177
        %v1179 = vmul.f32 %v1177, %v1178
        %v1180 = vsub.f32 2.0, %v1179
        %v1181 = vmul.f32 %v1178, %v1180
        %v1182 = vmul.f32 %v1174, %v1181
        %1184 = vrot.lane.b32.xlu0 %v1076, 120
        %v1185 = vpop.permute.xlu0 %1184
        %v1188 = vsel %vm518, %v1182, 0
        %1190 = vmatpush.msra.mxu0 0.0
        %1191 = vmatpush.msra.mxu0 0.0
        %1192 = vmatpush.msra.mxu0 0.0
        %1193 = vmatpush.msra.mxu0 0.0
        %1194 = vmatpush.msra.mxu0 0.0
        %1195 = vmatpush.msra.mxu0 0.0
        %1196 = vmatpush.msra.mxu0 0.0
        %1197 = vmatpush.msra.mxu0 0.0
        %1198 = vmatpush.msra.mxu0 0.0
        %1199 = vmatpush.msra.mxu0 0.0
        %1200 = vmatpush.msra.mxu0 0.0
        %1201 = vmatpush.msra.mxu0 0.0
        %1202 = vmatpush.msra.mxu0 0.0
        %1203 = vmatpush.msra.mxu0 0.0
        %1204 = vmatpush.msra.mxu0 0.0
        %1205 = vmatpush.msra.mxu0 %v1185
        %1206 = vmatmul.f32.gmra.mxu0 %v1188
        %v1207 = vpop.f32.mrf.mxu0
        %v1208 = vadd.f32 0.0, %v1207
        %1209 = vdwg.mxu0
        %1210 = vrot.lane.b32.xlu0 %v1037, 112
        %v1211 = vpop.permute.xlu0 %1210
        %1212 = vrot.lane.b32.xlu0 %v1056, 112
        %v1213 = vpop.permute.xlu0 %1212
        %v1214 = vsel %vm518, %v1211, 0
        %v1216 = vsel %vm518, %v1213, 0
        %1218 = vmatpush.xpose.msra.mxu0 0.0
        %1219 = vmatpush.xpose.msra.mxu0 0.0
        %1220 = vmatpush.xpose.msra.mxu0 0.0
        %1221 = vmatpush.xpose.msra.mxu0 0.0
        %1222 = vmatpush.xpose.msra.mxu0 0.0
        %1223 = vmatpush.xpose.msra.mxu0 0.0
        %1224 = vmatpush.xpose.msra.mxu0 0.0
        %1225 = vmatpush.xpose.msra.mxu0 0.0
        %1226 = vmatpush.xpose.msra.mxu0 0.0
        %1227 = vmatpush.xpose.msra.mxu0 0.0
        %1228 = vmatpush.xpose.msra.mxu0 0.0
        %1229 = vmatpush.xpose.msra.mxu0 0.0
        %1230 = vmatpush.xpose.msra.mxu0 0.0
        %1231 = vmatpush.xpose.msra.mxu0 0.0
        %1232 = vmatpush.xpose.msra.mxu0 0.0
        %1233 = vmatpush.xpose.msra.mxu0 %v1216
        %1234 = vmatmul.f32.gmra.mxu0 %v1214
        %v1235 = vpop.f32.mrf.mxu0
        %v1236 = vadd.f32 0.0, %v1235
        %1237 = vdwg.mxu0
        %v1238 = vsel %vm518, %v1236, -inf
        %1239 = vmax.xlane.f32.xlu0 %v1238
        %v1240 = vpop.xlane.xlu0 %1239
        %v1241 = vsub.f32 %v1236, %v1240
        %v1242 = vmul.f32 %v1241, 1.442695
        %v1243 = vpow.pop %v1242
        %v1244 = vsel %vm518, %v1243, 0.0
        %1245 = vadd.xlane.f32.xlu0 %v1244
        %v1246 = vpop.xlane.xlu0 %1245
        %v1247 = vrcp.pop %v1246
        %v1248 = vmul.f32 %v1246, %v1247
        %v1249 = vsub.f32 2.0, %v1248
        %v1250 = vmul.f32 %v1247, %v1249
        %v1251 = vmul.f32 %v1243, %v1250
        %1252 = vrot.lane.b32.xlu0 %v1076, 112
        %v1253 = vpop.permute.xlu0 %1252
        %v1256 = vsel %vm518, %v1251, 0
        %1258 = vmatpush.msra.mxu0 0.0
        %1259 = vmatpush.msra.mxu0 0.0
        %1260 = vmatpush.msra.mxu0 0.0
        %1261 = vmatpush.msra.mxu0 0.0
        %1262 = vmatpush.msra.mxu0 0.0
        %1263 = vmatpush.msra.mxu0 0.0
        %1264 = vmatpush.msra.mxu0 0.0
        %1265 = vmatpush.msra.mxu0 0.0
        %1266 = vmatpush.msra.mxu0 0.0
        %1267 = vmatpush.msra.mxu0 0.0
        %1268 = vmatpush.msra.mxu0 0.0
        %1269 = vmatpush.msra.mxu0 0.0
        %1270 = vmatpush.msra.mxu0 0.0
        %1271 = vmatpush.msra.mxu0 0.0
        %1272 = vmatpush.msra.mxu0 0.0
        %1273 = vmatpush.msra.mxu0 %v1253
        %1274 = vmatmul.f32.gmra.mxu0 %v1256
        %v1275 = vpop.f32.mrf.mxu0
        %v1276 = vadd.f32 0.0, %v1275
        %1277 = vdwg.mxu0
        %1278 = vrot.lane.b32.xlu0 %v1037, 104
        %v1279 = vpop.permute.xlu0 %1278
        %1280 = vrot.lane.b32.xlu0 %v1056, 104
        %v1281 = vpop.permute.xlu0 %1280
        %v1282 = vsel %vm518, %v1279, 0
        %v1284 = vsel %vm518, %v1281, 0
        %1286 = vmatpush.xpose.msra.mxu0 0.0
        %1287 = vmatpush.xpose.msra.mxu0 0.0
        %1288 = vmatpush.xpose.msra.mxu0 0.0
        %1289 = vmatpush.xpose.msra.mxu0 0.0
        %1290 = vmatpush.xpose.msra.mxu0 0.0
        %1291 = vmatpush.xpose.msra.mxu0 0.0
        %1292 = vmatpush.xpose.msra.mxu0 0.0
        %1293 = vmatpush.xpose.msra.mxu0 0.0
        %1294 = vmatpush.xpose.msra.mxu0 0.0
        %1295 = vmatpush.xpose.msra.mxu0 0.0
        %1296 = vmatpush.xpose.msra.mxu0 0.0
        %1297 = vmatpush.xpose.msra.mxu0 0.0
        %1298 = vmatpush.xpose.msra.mxu0 0.0
        %1299 = vmatpush.xpose.msra.mxu0 0.0
        %1300 = vmatpush.xpose.msra.mxu0 0.0
        %1301 = vmatpush.xpose.msra.mxu0 %v1284
        %1302 = vmatmul.f32.gmra.mxu0 %v1282
        %v1303 = vpop.f32.mrf.mxu0
        %v1304 = vadd.f32 0.0, %v1303
        %1305 = vdwg.mxu0
        %v1306 = vsel %vm518, %v1304, -inf
        %1307 = vmax.xlane.f32.xlu0 %v1306
        %v1308 = vpop.xlane.xlu0 %1307
        %v1309 = vsub.f32 %v1304, %v1308
        %v1310 = vmul.f32 %v1309, 1.442695
        %v1311 = vpow.pop %v1310
        %v1312 = vsel %vm518, %v1311, 0.0
        %1313 = vadd.xlane.f32.xlu0 %v1312
        %v1314 = vpop.xlane.xlu0 %1313
        %v1315 = vrcp.pop %v1314
        %v1316 = vmul.f32 %v1314, %v1315
        %v1317 = vsub.f32 2.0, %v1316
        %v1318 = vmul.f32 %v1315, %v1317
        %v1319 = vmul.f32 %v1311, %v1318
        %1320 = vrot.lane.b32.xlu0 %v1076, 104
        %v1321 = vpop.permute.xlu0 %1320
        %v1324 = vsel %vm518, %v1319, 0
        %1326 = vmatpush.msra.mxu0 0.0
        %1327 = vmatpush.msra.mxu0 0.0
        %1328 = vmatpush.msra.mxu0 0.0
        %1329 = vmatpush.msra.mxu0 0.0
        %1330 = vmatpush.msra.mxu0 0.0
        %1331 = vmatpush.msra.mxu0 0.0
        %1332 = vmatpush.msra.mxu0 0.0
        %1333 = vmatpush.msra.mxu0 0.0
        %1334 = vmatpush.msra.mxu0 0.0
        %1335 = vmatpush.msra.mxu0 0.0
        %1336 = vmatpush.msra.mxu0 0.0
        %1337 = vmatpush.msra.mxu0 0.0
        %1338 = vmatpush.msra.mxu0 0.0
        %1339 = vmatpush.msra.mxu0 0.0
        %1340 = vmatpush.msra.mxu0 0.0
        %1341 = vmatpush.msra.mxu0 %v1321
        %1342 = vmatmul.f32.gmra.mxu0 %v1324
        %v1343 = vpop.f32.mrf.mxu0
        %v1344 = vadd.f32 0.0, %v1343
        %1345 = vdwg.mxu0
        %1347 = vrot.lane.b32.xlu0 %v1208, 8
        %v1348 = vpop.permute.xlu0 %1347
        %1351 = vrot.lane.b32.xlu0 %v1276, 16
        %v1352 = vpop.permute.xlu0 %1351
        %1355 = vrot.lane.b32.xlu0 %v1344, 24
        %v1356 = vpop.permute.xlu0 %1355
        %v1358 = vsel %vm518, %v1139, %v1348
        %v1359 = vsel %vm800, %v1358, %v1352
        %v1360 = vsel %vm802, %v1359, %v1356
        %v1362 = vsel %vm420, %v1360, 0
        %1364 = vmatpush.msra.mxu0 0.0
        %1365 = vmatpush.msra.mxu0 0.0
        %1366 = vmatpush.msra.mxu0 0.0
        %1367 = vmatpush.msra.mxu0 0.0
        %1368 = vmatpush.msra.mxu0 0.0
        %1369 = vmatpush.msra.mxu0 0.0
        %1370 = vmatpush.msra.mxu0 0.0
        %1371 = vmatpush.msra.mxu0 0.0
        %1372 = vmatpush.msra.mxu0 0.0
        %1373 = vmatpush.msra.mxu0 0.0
        %1374 = vmatpush.msra.mxu0 0.0
        %1375 = vmatpush.msra.mxu0 0.0
        %1376 = vmatpush.msra.mxu0 %v970
        %1377 = vmatpush.msra.mxu0 %v969
        %1378 = vmatpush.msra.mxu0 %v968
        %1379 = vmatpush.msra.mxu0 %v967
        %1380 = vmatmul.f32.gmra.mxu0 %v1362
        %v1381 = vpop.f32.mrf.mxu0
        %v1382 = vadd.f32 0.0, %v1381
        %1383 = vdwg.mxu0
        %v1384 = vadd.f32 %v950, %v1382
        %v1385 = vperm.slane %v986, 2
        %v1386 = vadd.f32 %v1384, %v1385
        %v1387 = vsel %vm420, %v1386, 0.0
        %1388 = vadd.xlane.f32.xlu0 %v1387
        %v1389 = vpop.xlane.xlu0 %1388
        %v1390 = vmul.f32 %v1389, %v430
        %v1391 = vsub.f32 %v1386, %v1390
        %v1392 = vmul.f32 %v1391, %v1391
        %v1393 = vsel %vm420, %v1392, 0.0
        %1394 = vadd.xlane.f32.xlu0 %v1393
        %v1395 = vpop.xlane.xlu0 %1394
        %v1396 = vmul.f32 %v1395, %v430
        %v1397 = vadd.f32 %v1396, 1e-05
        %v1398 = vrsqrt.pop %v1397
        %v1399 = vmul.f32 %v1398, %v1397
        %v1400 = vmul.f32 %v1399, %v1398
        %v1401 = vmul.f32 0.5, %v1400
        %v1402 = vsub.f32 1.5, %v1401
        %v1403 = vmul.f32 %v1398, %v1402
        %vm1404 = vweird.f32 %v1397
        %vm1405 = vweird.f32 %v1398
        %vm1406 = vmor %vm1404, %vm1405
        %v1407 = vsel %vm1406, %v1398, %v1403
        %v1408 = vmul.f32 %v1391, %v1407
        %v1409 = vperm.slane %v986, 3
        %v1410 = vmul.f32 %v1408, %v1409
        %v1411 = vperm.slane %v986, 4
        %v1412 = vadd.f32 %v1410, %v1411
        %v1413 = vperm.slane %v987, 0
        %v1415 = vsel %vm420, %v1412, 0
        %1417 = vmatpush.msra.mxu0 0.0
        %1418 = vmatpush.msra.mxu0 0.0
        %1419 = vmatpush.msra.mxu0 0.0
        %1420 = vmatpush.msra.mxu0 0.0
        %1421 = vmatpush.msra.mxu0 0.0
        %1422 = vmatpush.msra.mxu0 0.0
        %1423 = vmatpush.msra.mxu0 0.0
        %1424 = vmatpush.msra.mxu0 0.0
        %1425 = vmatpush.msra.mxu0 0.0
        %1426 = vmatpush.msra.mxu0 0.0
        %1427 = vmatpush.msra.mxu0 0.0
        %1428 = vmatpush.msra.mxu0 0.0
        %1429 = vmatpush.msra.mxu0 %v975
        %1430 = vmatpush.msra.mxu0 %v974
        %1431 = vmatpush.msra.mxu0 %v973
        %1432 = vmatpush.msra.mxu0 %v972
        %1433 = vmatmul.f32.gmra.mxu0 %v1415
        %v1434 = vpop.f32.mrf.mxu0
        %v1435 = vadd.f32 %v1413, %v1434
        %1436 = vdwg.mxu0
        %v1437 = vmul.f32 %v1435, 0.5
        %v1438 = vmul.f32 %v1435, 0.70710677
        %v1439 = vmul.f32 %v1438, %v1438
        %v1440 = vmin.f32 16.0, %v1439
        %v1441 = vmul.f32 %v1440, 2.1237322e-06
        %v1442 = vadd.f32 %v1441, 0.00028619796
        %v1443 = vmul.f32 %v1440, %v1442
        %v1444 = vadd.f32 %v1443, 0.0036580483
        %v1445 = vmul.f32 %v1440, %v1444
        %v1446 = vadd.f32 %v1445, 0.05243302
        %v1447 = vmul.f32 %v1440, %v1446
        %v1448 = vadd.f32 %v1447, 0.18741608
        %v1449 = vmul.f32 %v1440, %v1448
        %v1450 = vadd.f32 %v1449, 1.1283791
        %v1451 = vmul.f32 %v1438, %v1450
        %v1452 = vmul.f32 %v1440, 3.8918573e-05
        %v1453 = vadd.f32 %v1452, 0.001143296
        %v1454 = vmul.f32 %v1440, %v1453
        %v1455 = vadd.f32 %v1454, 0.014752088
        %v1456 = vmul.f32 %v1440, %v1455
        %v1457 = vadd.f32 %v1456, 0.112945676
        %v1458 = vmul.f32 %v1440, %v1457
        %v1459 = vadd.f32 %v1458, 0.4994258
        %v1460 = vmul.f32 %v1440, %v1459
        %v1461 = vadd.f32 %v1460, 1.0
        %v1462 = vrcp.pop %v1461
        %v1463 = vmul.f32 %v1461, %v1462
        %v1464 = vsub.f32 1.0, %v1463
        %v1465 = vmul.f32 %v1462, %v1464
        %v1466 = vadd.f32 %v1462, %v1465
        %vm1467 = vweird.f32 %v1461
        %vm1468 = vweird.f32 %v1462
        %vm1469 = vmor %vm1467, %vm1468
        %v1470 = vsel %vm1469, %v1462, %v1466
        %v1471 = vand.u32 2147483647, %v1461
        %vm1472 = vcmp.eq.f32.partialorder %v1471, 8.507059e+37
        %v1473 = vand.u32 %v1461, 2147483648
        %v1474 = vor.u32 1.1754944e-38, %v1473
        %v1475 = vsel %vm1472, %v1474, %v1470
        %v1476 = vmul.f32 %v1451, %v1475
        %v1477 = vmin.f32 %v1476, 1.0
        %v1478 = vmax.f32 %v1477, -1.0
        %v1479 = vadd.f32 %v1478, 1.0
        %v1480 = vmul.f32 %v1437, %v1479
        %v1482 = vsel %vm924, %v1480, 0
        %1484 = vmatpush.msra.mxu0 0.0
        %1485 = vmatpush.msra.mxu0 0.0
        %1486 = vmatpush.msra.mxu0 0.0
        %1487 = vmatpush.msra.mxu0 0.0
        %1488 = vmatpush.msra.mxu0 0.0
        %1489 = vmatpush.msra.mxu0 0.0
        %1490 = vmatpush.msra.mxu0 0.0
        %1491 = vmatpush.msra.mxu0 0.0
        %1492 = vmatpush.msra.mxu0 %v984
        %1493 = vmatpush.msra.mxu0 %v983
        %1494 = vmatpush.msra.mxu0 %v982
        %1495 = vmatpush.msra.mxu0 %v981
        %1496 = vmatpush.msra.mxu0 %v980
        %1497 = vmatpush.msra.mxu0 %v979
        %1498 = vmatpush.msra.mxu0 %v978
        %1499 = vmatpush.msra.mxu0 %v977
        %1500 = vmatmul.f32.gmra.mxu0 %v1482
        %v1501 = vpop.f32.mrf.mxu0
        %v1502 = vadd.f32 0.0, %v1501
        %1503 = vdwg.mxu0
        %v1504 = vadd.f32 %v1386, %v1502
        %v1505 = vperm.slane %v986, 5
        %v1506 = vadd.f32 %v1504, %v1505
        %v1507 = vld [vmem:[%s9] sm:$0x1]
        %v1508 = vld [vmem:[%s9 + $0x1] sm:$0x1]
        %v1509 = vsel %vm420, %v1506, 0.0
        %1510 = vadd.xlane.f32.xlu0 %v1509
        %v1511 = vpop.xlane.xlu0 %1510
        %v1512 = vmul.f32 %v1511, %v430
        %v1513 = vsub.f32 %v1506, %v1512
        %v1514 = vmul.f32 %v1513, %v1513
        %v1515 = vsel %vm420, %v1514, 0.0
        %1516 = vadd.xlane.f32.xlu0 %v1515
        %v1517 = vpop.xlane.xlu0 %1516
        %v1518 = vmul.f32 %v1517, %v430
        %v1519 = vadd.f32 %v1518, 1e-05
        %v1520 = vrsqrt.pop %v1519
        %v1521 = vmul.f32 %v1520, %v1519
        %v1522 = vmul.f32 %v1521, %v1520
        %v1523 = vmul.f32 0.5, %v1522
        %v1524 = vsub.f32 1.5, %v1523
        %v1525 = vmul.f32 %v1520, %v1524
        %vm1526 = vweird.f32 %v1519
        %vm1527 = vweird.f32 %v1520
        %vm1528 = vmor %vm1526, %vm1527
        %v1529 = vsel %vm1528, %v1520, %v1525
        %v1530 = vmul.f32 %v1513, %v1529
        %v1531 = vperm.slane %v1507, 0
        %v1532 = vmul.f32 %v1530, %v1531
        %v1533 = vperm.slane %v1508, 0
        %v1534 = vadd.f32 %v1532, %v1533
        %1535 = vst.msk [vmem:[%s384] sm:$0xff] %vm420, %v1534
        %s1536 = sand.u32 %s249, 1
        %s1537 = scalar_lea.sflag [#allocation4], %s1536
        %s1538 = sand.u32 %s249, 1
        %s1539 = smul.addr %s1538, 8
        %s1540 = scalar_lea.vmem [#allocation7], %s1539
        // Predicated region
        $region69: #{transformer_forward.1} parent=59 // pred_check
          %p1541 = pneg %p259
        $region70: #{transformer_forward.1} parent=59 // pred_check_branch
          %1543 = sbr.rel (%p1541) target = $region72
        $region71: #{transformer_forward.1} parent=59 // pred_region
          %1545 = vsyncadd %s1537, 0
          %s1546 = smul.addr %s26, 8
          %s1547 = scalar_lea.hbm %s10, %s1546
          %s1549 = sshll.u32 %s1540, 4
          %s1550 = int_to_ptr.vmem [resolvable:$true] %s1549
          %s1551 = sshll.u32 %s1547, 4
          %s1552 = int_to_ptr.hbm [resolvable:$true] %s1551
          %1554 = dma.vmem_to_hbm [thread:$0]  %s1550, 128, %s1552, %s1537
        $region72: #{transformer_forward.1} parent=59 // pred_fallthru
          _
      $region60: #{transformer_forward.1} parent=5 // pred_fallthru
        _
      %p1555 = scmp.le.s32.totalorder 2, %s21
      // Predicated region
      $region73: #{transformer_forward.1} parent=5 // pred_check
        %p1556 = pneg %p1555
      $region74: #{transformer_forward.1} parent=5 // pred_check_branch
        %1558 = sbr.rel (%p1556) target = $region76
      $region75: #{transformer_forward.1} parent=5 // pred_region
        %s1559 = ssub.s32 %s21, 2
        // Predicated region
        $region77: #{transformer_forward.1} parent=75 // pred_check
          %p1560 = pneg %p265
        $region78: #{transformer_forward.1} parent=75 // pred_check_branch
          %1562 = sbr.rel (%p1560) target = $region80
        $region79: #{transformer_forward.1} parent=75 // pred_region
          %s1563 = sand.u32 %s250, 1
          %s1564 = scalar_lea.sflag [#allocation4], %s1563
          %s1565 = sand.u32 %s250, 1
          %s1566 = smul.addr %s1565, 8
          %s1567 = scalar_lea.vmem [#allocation7], %s1566
          %1569 = dma.done %s1564, 128
        $region80: #{transformer_forward.1} parent=75 // pred_fallthru
          _
      $region76: #{transformer_forward.1} parent=5 // pred_fallthru
        _
    $region6: #{transformer_forward.1} parent=1 // loop_footer
      %s25 = sadd.s32 1, %s21
    $region7: #{transformer_forward.1} parent=1 // loop_footer_branch
      %20 = sbr.rel target = $region3
    $region8: #{transformer_forward.1} parent=1 // loop_exit
      _
    %1570 = vsyncpa [#allocation3], 1
    %s1571 = scalar_lea.sflag [#allocation3], 1
    %1572 = vsyncpa %s1571, 1
    %1573 = vsyncpa [#allocation6], 1
    %1574 = vsyncpa [#allocation4], 1
    %s1575 = scalar_lea.sflag [#allocation4], 1
    %1576 = vsyncpa %s1575, 1

</llo_original>
